<compile_context>
chip_gen: v7x
topology: tpu7x:2x2x1
jax: 0.10.0
libtpu: 0.0.40
codegen_flags: <defaults>
</compile_context>

<pallas_src>
import jax
import jax.numpy as jnp
from jax import lax
from jax.experimental import pallas as pl
from jax.experimental.pallas import tpu as pltpu

LN_EPS = 1e-6  # ConvNeXt LayerNorm default


def _cnext_upsample_kernel(x1_ref, x2_ref, g_ref, b_ref, wf_ref, wpw_ref,
                           bias_ref, o_ref):
    """One (batch, row-tile) grid step.

    x1_ref  : (1, th, W, C1)        bf16 low-res input tile
    x2_ref  : (1, th, K, W, K*C2)   bf16 skip tile (row-subpixel axis pre-split)
    g_ref   : (1, C1)        f32    LayerNorm gamma
    b_ref   : (1, C1)        f32    LayerNorm beta
    wf_ref  : (K, C1, K*C2)  bf16   convT folded with the pw's x1-half, per sub-row
    wpw_ref : (K*C2, K*C2)   bf16   block-diagonal pw weight for the skip path
    bias_ref: (1, K*C2)      f32    pw bias, tiled over width sub-pixels
    o_ref   : (1, th, K, W, K*C2)   bf16 output tile (same pre-split layout)
    """
    th, W, C1 = x1_ref.shape[1], x1_ref.shape[2], x1_ref.shape[3]
    K, KC2 = o_ref.shape[2], o_ref.shape[4]

    # ---- channels-first LayerNorm (per pixel, over C1), statistics in f32 ----
    x1 = x1_ref[0].astype(jnp.float32)                       # (th, W, C1)
    mu = jnp.mean(x1, axis=-1, keepdims=True)
    xc = x1 - mu
    var = jnp.mean(xc * xc, axis=-1, keepdims=True)
    xn = xc * lax.rsqrt(var + LN_EPS) * g_ref[...] + b_ref[...]
    xf = xn.reshape(th * W, C1).astype(jnp.bfloat16)          # bf16 MXU operand

    # ---- skip path: ONE bf16 matmul over the whole tile (+ bias, once) ----
    # Flattened row order (th, K, W) already matches the output layout.
    x2f = x2_ref[0].reshape(th * K * W, KC2)                  # bf16, free regroup
    skip = lax.dot_general(x2f, wpw_ref[...],
                           dimension_numbers=(((1,), (0,)), ((), ())),
                           preferred_element_type=jnp.float32)
    skip = (skip + bias_ref[...]).reshape(th, K, W, KC2)      # f32

    # ---- upsample path: one fat folded matmul per row sub-pixel ----
    for a in range(K):                                        # tiny static unroll
        up = lax.dot_general(xf, wf_ref[a],
                             dimension_numbers=(((1,), (0,)), ((), ())),
                             preferred_element_type=jnp.float32)
        out_a = up.reshape(th, W, KC2) + skip[:, a]
        o_ref[0, :, a] = out_a.astype(o_ref.dtype)            # contiguous slab store


def _pick_row_tile(H, W, C1, K, KC2, N, weight_bytes, budget_bytes):
    """Largest divisor of H whose per-step VMEM fits the budget; prefer an even
    number of parallel grid steps (v7x shards 'parallel' axes over 2 TCs)."""
    act_row = 2 * (W * C1 + 2 * K * W * KC2) * 2              # double-buffered bf16
    f32_row = (2 * W * C1 + K * W * KC2 + W * KC2) * 4        # in-kernel f32 temps
    per_row = act_row + f32_row
    fits = [d for d in range(1, H + 1)
            if H % d == 0 and d * per_row + weight_bytes <= budget_bytes]
    if not fits:
        return 1
    th = max(fits)
    if (N * (H // th)) % 2 == 1:
        even = [d for d in fits if (N * (H // d)) % 2 == 0]
        if even:
            th = max(even)
    return th


def cnext_upsample_nhwc(x1, x2, params, k=2, s=2, p=0, row_tile=None,
                        vmem_budget_bytes=40 << 20):
    """Fused CNeXtUpSample forward — NHWC bf16 fast path.

    x1: (N, H, W, C1);  x2: (N, K*H, K*W, C2).  Returns (N, K*H, K*W, C2) bf16.

    params:
      ln_g, ln_b : (C1,)              LayerNorm affine
      w_up       : (C1, C2, k, k)     ConvTranspose2d weight (PyTorch layout)
      w_pw       : (C2, 2*C2, 1, 1)   1x1 Conv2d weight (PyTorch layout)
      b_pw       : (C2,)              1x1 Conv2d bias
    """
    # TODO(synk): general (k, s, p) with overlapping transposed-conv taps is not
    # implemented; only the standard non-overlapping upsample is fused.
    assert k == s and p == 0, "only the standard k==s, p==0 upsample is fused"
    K = k
    N, H, W, C1 = x1.shape
    C2 = params["w_up"].shape[1]
    KC2 = K * C2
    assert x2.shape == (N, K * H, K * W, C2), x2.shape

    x1 = x1.astype(jnp.bfloat16)
    # Free row-major regroup: (N, K*H, K*W, C2) -> (N, H, K, W, K*C2)
    x2r = x2.astype(jnp.bfloat16).reshape(N, H, K, W, KC2)

    # ---- fold ConvTranspose + the x1-half of the 1x1 pw conv (O(weights)) ----
    w_up = params["w_up"].astype(jnp.float32)                 # (C1, C2, K, K)
    wpw = params["w_pw"][:, :, 0, 0].astype(jnp.float32)      # (C2, 2*C2)
    wpw1, wpw2 = wpw[:, :C2], wpw[:, C2:]                     # (C2, C2) each
    # wf[a, cin, b*C2 + cout] = sum_m w_up[cin, m, a, b] * wpw1[cout, m]
    wf = jnp.einsum("ioab,po->aibp", w_up, wpw1).reshape(K, C1, KC2)
    wf = wf.astype(jnp.bfloat16)
    # Block-diagonal pw weight for the (already interleaved) skip channels.
    wpw2_blk = jnp.kron(jnp.eye(K, dtype=jnp.float32), wpw2.T).astype(jnp.bfloat16)
    bias_t = jnp.tile(params["b_pw"].astype(jnp.float32), K).reshape(1, KC2)
    gamma = params["ln_g"].reshape(1, C1).astype(jnp.float32)
    beta = params["ln_b"].reshape(1, C1).astype(jnp.float32)

    # TODO(synk): pad KC2 up to a 128-lane multiple (pad wf/wpw2_blk/bias and the
    # output channel dim, slice afterwards) when C2 is not a multiple of 64, to
    # get fully lane-dense (unmasked) stores.

    weight_bytes = (K * C1 * KC2 + KC2 * KC2) * 2 + (2 * C1 + 2 * KC2) * 4
    th = (_pick_row_tile(H, W, C1, K, KC2, N, weight_bytes, vmem_budget_bytes)
          if row_tile is None else row_tile)
    assert H % th == 0, (H, th)
    num_t = H // th

    act_tile_bytes = 2 * th * (W * C1 + 2 * K * W * KC2) * 2
    f32_tmp_bytes = th * (2 * W * C1 + K * W * KC2 + W * KC2) * 4
    vmem_limit = int(min(64 << 20,
                         max(16 << 20,
                             act_tile_bytes + f32_tmp_bytes + weight_bytes
                             + (4 << 20))))

    single = pl.Buffered(1)   # constant index_map -> never re-fetched; 1 buffer
    out_r = pl.pallas_call(
        _cnext_upsample_kernel,
        out_shape=jax.ShapeDtypeStruct((N, H, K, W, KC2), jnp.bfloat16),
        grid=(N, num_t),
        in_specs=[
            pl.BlockSpec((1, th, W, C1), lambda n, t: (n, t, 0, 0)),
            pl.BlockSpec((1, th, K, W, KC2), lambda n, t: (n, t, 0, 0, 0)),
            pl.BlockSpec((1, C1), lambda n, t: (0, 0), pipeline_mode=single),
            pl.BlockSpec((1, C1), lambda n, t: (0, 0), pipeline_mode=single),
            pl.BlockSpec((K, C1, KC2), lambda n, t: (0, 0, 0), pipeline_mode=single),
            pl.BlockSpec((KC2, KC2), lambda n, t: (0, 0), pipeline_mode=single),
            pl.BlockSpec((1, KC2), lambda n, t: (0, 0), pipeline_mode=single),
        ],
        out_specs=pl.BlockSpec((1, th, K, W, KC2), lambda n, t: (n, t, 0, 0, 0)),
        compiler_params=pltpu.CompilerParams(
            dimension_semantics=("parallel", "parallel"),
            vmem_limit_bytes=vmem_limit),
    )(x1, x2r, gamma, beta, wf, wpw2_blk, bias_t)

    # Free row-major regroup back to NHWC.
    return out_r.reshape(N, K * H, K * W, C2)


def cnext_upsample(x1_nchw, x2_nchw, params, k=2, s=2, p=0, row_tile=None):
    """PyTorch-parity wrapper (NCHW in / NCHW out).  Real pipelines should call
    cnext_upsample_nhwc directly with bf16 NHWC tensors — the transposes here
    exist only for interface parity / testing."""
    x1 = jnp.transpose(x1_nchw, (0, 2, 3, 1))
    x2 = jnp.transpose(x2_nchw, (0, 2, 3, 1))
    out = cnext_upsample_nhwc(x1, x2, params, k=k, s=s, p=p, row_tile=row_tile)
    return jnp.transpose(out, (0, 3, 1, 2))


# ----------------- pure-JAX f32 reference (independent check) -----------------
def cnext_upsample_ref(x1_nchw, x2_nchw, params, k=2, s=2, p=0):
    x1 = jnp.transpose(x1_nchw, (0, 2, 3, 1)).astype(jnp.float32)   # NHWC
    x2 = jnp.transpose(x2_nchw, (0, 2, 3, 1)).astype(jnp.float32)
    # channels-first LayerNorm == LN over last dim in NHWC
    mu = x1.mean(-1, keepdims=True)
    var = ((x1 - mu) ** 2).mean(-1, keepdims=True)
    xn = (x1 - mu) / jnp.sqrt(var + LN_EPS) * params["ln_g"] + params["ln_b"]
    # ConvTranspose2d(stride=s, pad=p, bias=False) == dilated conv w/ flipped kernel
    w = params["w_up"]                                               # (C1, C2, k, k)
    w_flip = jnp.transpose(w[:, :, ::-1, ::-1], (2, 3, 0, 1))        # HWIO
    up = lax.conv_general_dilated(
        xn, w_flip, window_strides=(1, 1),
        padding=((k - 1 - p, k - 1 - p), (k - 1 - p, k - 1 - p)),
        lhs_dilation=(s, s),
        dimension_numbers=("NHWC", "HWIO", "NHWC"))
    cat = jnp.concatenate([up, x2], axis=-1)
    wpw = params["w_pw"][:, :, 0, 0]                                 # (C2, 2*C2)
    out = jnp.einsum("nhwc,oc->nhwo", cat, wpw) + params["b_pw"]
    return jnp.transpose(out, (0, 3, 1, 2))


if __name__ == "__main__":
    N, C1, C2, H, W = 2, 4, 8, 16, 16
    K, S, P = 2, 2, 0  # standard 2x upsample

    key = jax.random.PRNGKey(0)
    ks = jax.random.split(key, 8)
    # bf16 inputs (the kernel's native I/O dtype); the f32 reference sees the
    # same bf16-quantized values, so the comparison isolates kernel math.
    x1 = jax.random.normal(ks[0], (N, C1, H, W), jnp.float32).astype(jnp.bfloat16)
    x2 = jax.random.normal(ks[1], (N, C2, K * H, K * W),
                           jnp.float32).astype(jnp.bfloat16)

    params = {
        "ln_g": 1.0 + 0.1 * jax.random.normal(ks[2], (C1,), jnp.float32),
        "ln_b": 0.1 * jax.random.normal(ks[3], (C1,), jnp.float32),
        "w_up": 0.2 * jax.random.normal(ks[4], (C1, C2, K, K), jnp.float32),
        "w_pw": 0.2 * jax.random.normal(ks[5], (C2, 2 * C2, 1, 1), jnp.float32),
        "b_pw": 0.1 * jax.random.normal(ks[6], (C2,), jnp.float32),
    }

    out = jax.block_until_ready(cnext_upsample(x1, x2, params, k=K, s=S, p=P))
    ref = jax.block_until_ready(cnext_upsample_ref(x1, x2, params, k=K, s=S, p=P))

    assert out.shape == (N, C2, K * H, K * W), out.shape
    out_f32 = out.astype(jnp.float32)
    err = float(jnp.max(jnp.abs(out_f32 - ref)))
    # bf16 operands / bf16 output vs. f32 reference -> relaxed tolerance.
    assert jnp.allclose(out_f32, ref, atol=7.5e-2, rtol=5e-2), err
    print("KERNEL_OK")
</pallas_src>

<mosaic_0001>
module attributes {stable_mosaic.version = 11 : i64} {
  func.func @_cnext_upsample_kernel(%arg0: i32, %arg1: i32, %arg2: memref<1x16x16x4xbf16, #tpu.memory_space<vmem>>, %arg3: memref<1x16x2x16x16xbf16, #tpu.memory_space<vmem>>, %arg4: memref<1x4xf32, #tpu.memory_space<vmem>>, %arg5: memref<1x4xf32, #tpu.memory_space<vmem>>, %arg6: memref<2x4x16xbf16, #tpu.memory_space<vmem>>, %arg7: memref<16x16xbf16, #tpu.memory_space<vmem>>, %arg8: memref<1x16xf32, #tpu.memory_space<vmem>>, %arg9: memref<1x16x2x16x16xbf16, #tpu.memory_space<vmem>>) attributes {dimension_semantics = [#tpu.dimension_semantics<parallel>, #tpu.dimension_semantics<parallel>], iteration_bounds = array<i64: 2, 1>, scalar_prefetch = 0 : i64, scratch_operands = 0 : i64, tpu.core_type = #tpu.core_type<tc>, window_params = [{transform_indices = @transform_0, window_bounds = array<i64: 1, 16, 16, 4>}, {transform_indices = @transform_1, window_bounds = array<i64: 1, 16, 2, 16, 16>}, {pipeline_mode = #tpu.pipeline_mode<synchronous>, transform_indices = @transform_2, window_bounds = array<i64: 1, 4>}, {pipeline_mode = #tpu.pipeline_mode<synchronous>, transform_indices = @transform_3, window_bounds = array<i64: 1, 4>}, {pipeline_mode = #tpu.pipeline_mode<synchronous>, transform_indices = @transform_4, window_bounds = array<i64: 2, 4, 16>}, {pipeline_mode = #tpu.pipeline_mode<synchronous>, transform_indices = @transform_5, window_bounds = array<i64: 16, 16>}, {pipeline_mode = #tpu.pipeline_mode<synchronous>, transform_indices = @transform_6, window_bounds = array<i64: 1, 16>}, {transform_indices = @transform_7, window_bounds = array<i64: 1, 16, 2, 16, 16>}]} {
    %c0 = arith.constant 0 : index
    %c0_0 = arith.constant 0 : index
    %c0_1 = arith.constant 0 : index
    %c0_2 = arith.constant 0 : index
    %0 = vector.load %arg2[%c0, %c0_0, %c0_1, %c0_2] : memref<1x16x16x4xbf16, #tpu.memory_space<vmem>>, vector<1x16x16x4xbf16>
    %1 = vector.shape_cast %0 : vector<1x16x16x4xbf16> to vector<16x16x4xbf16>
    %2 = arith.extf %1 : vector<16x16x4xbf16> to vector<16x16x4xf32>
    %cst = arith.constant dense<0.000000e+00> : vector<16x16xf32>
    %3 = vector.multi_reduction <add>, %2, %cst [2] : vector<16x16x4xf32> to vector<16x16xf32>
    %4 = vector.shape_cast %3 : vector<16x16xf32> to vector<16x16x1xf32>
    %cst_3 = arith.constant 4.000000e+00 : f32
    %5 = vector.broadcast %cst_3 : f32 to vector<16x16x1xf32>
    %6 = arith.divf %4, %5 : vector<16x16x1xf32>
    %7 = vector.broadcast %6 : vector<16x16x1xf32> to vector<16x16x4xf32>
    %8 = arith.subf %2, %7 : vector<16x16x4xf32>
    %9 = arith.mulf %8, %8 : vector<16x16x4xf32>
    %cst_4 = arith.constant dense<0.000000e+00> : vector<16x16xf32>
    %10 = vector.multi_reduction <add>, %9, %cst_4 [2] : vector<16x16x4xf32> to vector<16x16xf32>
    %11 = vector.shape_cast %10 : vector<16x16xf32> to vector<16x16x1xf32>
    %cst_5 = arith.constant 4.000000e+00 : f32
    %12 = vector.broadcast %cst_5 : f32 to vector<16x16x1xf32>
    %13 = arith.divf %11, %12 : vector<16x16x1xf32>
    %cst_6 = arith.constant 9.99999997E-7 : f32
    %14 = vector.broadcast %cst_6 : f32 to vector<16x16x1xf32>
    %15 = arith.addf %13, %14 : vector<16x16x1xf32>
    %16 = math.rsqrt %15 : vector<16x16x1xf32>
    %17 = vector.broadcast %16 : vector<16x16x1xf32> to vector<16x16x4xf32>
    %18 = arith.mulf %8, %17 : vector<16x16x4xf32>
    %c0_7 = arith.constant 0 : index
    %c0_8 = arith.constant 0 : index
    %19 = vector.load %arg4[%c0_7, %c0_8] : memref<1x4xf32, #tpu.memory_space<vmem>>, vector<1x4xf32>
    %20 = vector.shape_cast %19 : vector<1x4xf32> to vector<1x1x4xf32>
    %21 = vector.broadcast %20 : vector<1x1x4xf32> to vector<16x16x4xf32>
    %22 = arith.mulf %18, %21 : vector<16x16x4xf32>
    %c0_9 = arith.constant 0 : index
    %c0_10 = arith.constant 0 : index
    %23 = vector.load %arg5[%c0_9, %c0_10] : memref<1x4xf32, #tpu.memory_space<vmem>>, vector<1x4xf32>
    %24 = vector.shape_cast %23 : vector<1x4xf32> to vector<1x1x4xf32>
    %25 = vector.broadcast %24 : vector<1x1x4xf32> to vector<16x16x4xf32>
    %26 = arith.addf %22, %25 : vector<16x16x4xf32>
    %27 = vector.shape_cast %26 : vector<16x16x4xf32> to vector<256x4xf32>
    %28 = arith.truncf %27 : vector<256x4xf32> to vector<256x4xbf16>
    %c0_11 = arith.constant 0 : index
    %c0_12 = arith.constant 0 : index
    %c0_13 = arith.constant 0 : index
    %c0_14 = arith.constant 0 : index
    %c0_15 = arith.constant 0 : index
    %29 = vector.load %arg3[%c0_11, %c0_12, %c0_13, %c0_14, %c0_15] : memref<1x16x2x16x16xbf16, #tpu.memory_space<vmem>>, vector<1x16x2x16x16xbf16>
    %30 = vector.shape_cast %29 : vector<1x16x2x16x16xbf16> to vector<16x2x16x16xbf16>
    %31 = vector.shape_cast %30 : vector<16x2x16x16xbf16> to vector<512x16xbf16>
    %c0_16 = arith.constant 0 : index
    %c0_17 = arith.constant 0 : index
    %32 = vector.load %arg7[%c0_16, %c0_17] : memref<16x16xbf16, #tpu.memory_space<vmem>>, vector<16x16xbf16>
    %cst_18 = arith.constant dense<0.000000e+00> : vector<512x16xf32>
    %33 = tpu.matmul %31, %32, %cst_18 {dimension_numbers = #tpu.dot_dimension_numbers<[1], [0], [0], [1], [0, 0, 1, 1], [], []>} : vector<512x16xbf16>, vector<16x16xbf16>, vector<512x16xf32> -> vector<512x16xf32>
    %c0_19 = arith.constant 0 : index
    %c0_20 = arith.constant 0 : index
    %34 = vector.load %arg8[%c0_19, %c0_20] : memref<1x16xf32, #tpu.memory_space<vmem>>, vector<1x16xf32>
    %35 = vector.broadcast %34 : vector<1x16xf32> to vector<512x16xf32>
    %36 = arith.addf %33, %35 : vector<512x16xf32>
    %37 = vector.shape_cast %36 : vector<512x16xf32> to vector<16x2x16x16xf32>
    %c0_21 = arith.constant 0 : index
    %c0_22 = arith.constant 0 : index
    %c0_23 = arith.constant 0 : index
    %38 = vector.load %arg6[%c0_21, %c0_22, %c0_23] : memref<2x4x16xbf16, #tpu.memory_space<vmem>>, vector<1x4x16xbf16>
    %39 = vector.shape_cast %38 : vector<1x4x16xbf16> to vector<4x16xbf16>
    %cst_24 = arith.constant dense<0.000000e+00> : vector<256x16xf32>
    %40 = tpu.matmul %28, %39, %cst_24 {dimension_numbers = #tpu.dot_dimension_numbers<[1], [0], [0], [1], [0, 0, 1, 1], [], []>} : vector<256x4xbf16>, vector<4x16xbf16>, vector<256x16xf32> -> vector<256x16xf32>
    %41 = vector.shape_cast %40 : vector<256x16xf32> to vector<16x16x16xf32>
    %42 = vector.extract_strided_slice %37 {offsets = [0, 0, 0, 0], sizes = [16, 1, 16, 16], strides = [1, 1, 1, 1]} : vector<16x2x16x16xf32> to vector<16x1x16x16xf32>
    %43 = vector.shape_cast %42 : vector<16x1x16x16xf32> to vector<16x16x16xf32>
    %44 = arith.addf %41, %43 : vector<16x16x16xf32>
    %45 = arith.truncf %44 : vector<16x16x16xf32> to vector<16x16x16xbf16>
    %c0_25 = arith.constant 0 : index
    %c0_26 = arith.constant 0 : index
    %c0_27 = arith.constant 0 : index
    %c0_28 = arith.constant 0 : index
    %c0_29 = arith.constant 0 : index
    %46 = vector.load %arg9[%c0_25, %c0_26, %c0_27, %c0_28, %c0_29] : memref<1x16x2x16x16xbf16, #tpu.memory_space<vmem>>, vector<1x16x1x16x16xbf16>
    %47 = vector.shape_cast %46 : vector<1x16x1x16x16xbf16> to vector<16x16x16xbf16>
    %48 = vector.shape_cast %45 : vector<16x16x16xbf16> to vector<1x16x1x16x16xbf16>
    tpu.vector_store %arg9[%c0_25, %c0_26, %c0_27, %c0_28, %c0_29], %48 {strides = array<i32>} : memref<1x16x2x16x16xbf16, #tpu.memory_space<vmem>>, vector<1x16x1x16x16xbf16>,
    %c1 = arith.constant 1 : index
    %c0_30 = arith.constant 0 : index
    %c0_31 = arith.constant 0 : index
    %49 = vector.load %arg6[%c1, %c0_30, %c0_31] : memref<2x4x16xbf16, #tpu.memory_space<vmem>>, vector<1x4x16xbf16>
    %50 = vector.shape_cast %49 : vector<1x4x16xbf16> to vector<4x16xbf16>
    %cst_32 = arith.constant dense<0.000000e+00> : vector<256x16xf32>
    %51 = tpu.matmul %28, %50, %cst_32 {dimension_numbers = #tpu.dot_dimension_numbers<[1], [0], [0], [1], [0, 0, 1, 1], [], []>} : vector<256x4xbf16>, vector<4x16xbf16>, vector<256x16xf32> -> vector<256x16xf32>
    %52 = vector.shape_cast %51 : vector<256x16xf32> to vector<16x16x16xf32>
    %53 = vector.extract_strided_slice %37 {offsets = [0, 1, 0, 0], sizes = [16, 1, 16, 16], strides = [1, 1, 1, 1]} : vector<16x2x16x16xf32> to vector<16x1x16x16xf32>
    %54 = vector.shape_cast %53 : vector<16x1x16x16xf32> to vector<16x16x16xf32>
    %55 = arith.addf %52, %54 : vector<16x16x16xf32>
    %56 = arith.truncf %55 : vector<16x16x16xf32> to vector<16x16x16xbf16>
    %c0_33 = arith.constant 0 : index
    %c0_34 = arith.constant 0 : index
    %c1_35 = arith.constant 1 : index
    %c0_36 = arith.constant 0 : index
    %c0_37 = arith.constant 0 : index
    %57 = vector.load %arg9[%c0_33, %c0_34, %c1_35, %c0_36, %c0_37] : memref<1x16x2x16x16xbf16, #tpu.memory_space<vmem>>, vector<1x16x1x16x16xbf16>
    %58 = vector.shape_cast %57 : vector<1x16x1x16x16xbf16> to vector<16x16x16xbf16>
    %59 = vector.shape_cast %56 : vector<16x16x16xbf16> to vector<1x16x1x16x16xbf16>
    tpu.vector_store %arg9[%c0_33, %c0_34, %c1_35, %c0_36, %c0_37], %59 {strides = array<i32>} : memref<1x16x2x16x16xbf16, #tpu.memory_space<vmem>>, vector<1x16x1x16x16xbf16>,
    return
  }
  func.func @transform_0(%arg0: i32, %arg1: i32) -> (i32, i32, i32, i32) {
    %c0_i32 = arith.constant 0 : i32
    %c0_i32_0 = arith.constant 0 : i32
    %c0_i32_1 = arith.constant 0 : i32
    return %arg0, %arg1, %c0_i32, %c0_i32_0 : i32, i32, i32, i32
  }
  func.func @transform_1(%arg0: i32, %arg1: i32) -> (i32, i32, i32, i32, i32) {
    %c0_i32 = arith.constant 0 : i32
    %c0_i32_0 = arith.constant 0 : i32
    %c0_i32_1 = arith.constant 0 : i32
    %c0_i32_2 = arith.constant 0 : i32
    return %arg0, %arg1, %c0_i32, %c0_i32_0, %c0_i32_1 : i32, i32, i32, i32, i32
  }
  func.func @transform_2(%arg0: i32, %arg1: i32) -> (i32, i32) {
    %c0_i32 = arith.constant 0 : i32
    %c0_i32_0 = arith.constant 0 : i32
    %c0_i32_1 = arith.constant 0 : i32
    return %c0_i32, %c0_i32_0 : i32, i32
  }
  func.func @transform_3(%arg0: i32, %arg1: i32) -> (i32, i32) {
    %c0_i32 = arith.constant 0 : i32
    %c0_i32_0 = arith.constant 0 : i32
    %c0_i32_1 = arith.constant 0 : i32
    return %c0_i32, %c0_i32_0 : i32, i32
  }
  func.func @transform_4(%arg0: i32, %arg1: i32) -> (i32, i32, i32) {
    %c0_i32 = arith.constant 0 : i32
    %c0_i32_0 = arith.constant 0 : i32
    %c0_i32_1 = arith.constant 0 : i32
    %c0_i32_2 = arith.constant 0 : i32
    return %c0_i32, %c0_i32_0, %c0_i32_1 : i32, i32, i32
  }
  func.func @transform_5(%arg0: i32, %arg1: i32) -> (i32, i32) {
    %c0_i32 = arith.constant 0 : i32
    %c0_i32_0 = arith.constant 0 : i32
    %c0_i32_1 = arith.constant 0 : i32
    return %c0_i32, %c0_i32_0 : i32, i32
  }
  func.func @transform_6(%arg0: i32, %arg1: i32) -> (i32, i32) {
    %c0_i32 = arith.constant 0 : i32
    %c0_i32_0 = arith.constant 0 : i32
    %c0_i32_1 = arith.constant 0 : i32
    return %c0_i32, %c0_i32_0 : i32, i32
  }
  func.func @transform_7(%arg0: i32, %arg1: i32) -> (i32, i32, i32, i32, i32) {
    %c0_i32 = arith.constant 0 : i32
    %c0_i32_0 = arith.constant 0 : i32
    %c0_i32_1 = arith.constant 0 : i32
    %c0_i32_2 = arith.constant 0 : i32
    return %arg0, %arg1, %c0_i32, %c0_i32_0, %c0_i32_1 : i32, i32, i32, i32, i32
  }
}

</mosaic_0001>

<llo_original>
// kernel: tpu_custom_call.1
$region0: #{tpu_custom_call.1}
  #allocation0 [shape = 'u32[]', space=smem, size = 0x4, offset = 0x4, fixed_abs, tag = 'smem constant byte address 0x4 - core index']
  #allocation1 [shape = 'u32[144,128]{1,0:T(1,128)}', space=vmem, size = 0x12000, scoped, tag = 'internal scratch']
  %s0 = inlined_call_operand.vmem [shape: bf16[2,16,16,4], index: 0, kind: input, shape index: {}]
  %s1 = inlined_call_operand.hbm [shape: bf16[2,16,2,16,16], index: 1, kind: input, shape index: {}]
  %s2 = inlined_call_operand.vmem [shape: f32[1,4], index: 2, kind: input, shape index: {}]
  %s3 = inlined_call_operand.vmem [shape: f32[1,4], index: 3, kind: input, shape index: {}]
  %s4 = inlined_call_operand.vmem [shape: bf16[2,4,16], index: 4, kind: input, shape index: {}]
  %s5 = inlined_call_operand.vmem [shape: bf16[16,16], index: 5, kind: input, shape index: {}]
  %s6 = inlined_call_operand.vmem [shape: f32[1,16], index: 6, kind: input, shape index: {}]
  %s7 = inlined_call_operand.hbm [shape: bf16[2,16,2,16,16], index: 7, kind: output, shape index: {}]
  %s8 = sld [smem:[#allocation0]]
  $region65: #{tpu_custom_call.1} parent=0
    _
  %s10 = ssub.s32 1, %s8
  %s11 = scalar_select 0, %s10, %s8
  $region1: #{tpu_custom_call.1} parent=0
    #allocation2 [shape = 'u8[262144]{0}', space=vmem, size = 0x40000, scoped, tag = 'input window, operand 1']
    #allocation3 [shape = 's32[2]{0}', space=sflag, size = 0x8, scoped, tag = 'scoped memory for tpu_custom_call.1']
    #allocation4 [shape = 's32[2]{0}', space=sflag, size = 0x8, scoped, tag = 'scoped memory for tpu_custom_call.1']
    #allocation5 [shape = 'u8[262144]{0}', space=vmem, size = 0x40000, scoped, tag = 'output window, operand 0']
    %12 = vsyncpa [#allocation3], 0
    %s13 = scalar_lea.sflag [#allocation3], 1
    %14 = vsyncpa %s13, 0
    %15 = vsyncpa [#allocation4], 0
    %s16 = scalar_lea.sflag [#allocation4], 1
    %17 = vsyncpa %s16, 0
    loop: start=0, step=1, limit=4
    $region2: #{tpu_custom_call.1} parent=1 // loop_pre_header
      _
    $region3: #{tpu_custom_call.1} parent=1 // loop_header
      %s19 = sphi 0, %s23
      %p20 = scmp.ge.s32.totalorder %s19, 4
      %s26 = sphi 0, %s38
      %s27 = sphi 0, %s34
      %s28 = sphi 0, %s26
      %s29 = sphi 0, %s27
      %s30 = sphi 0, %s28
      %s31 = sphi 0, %s29
      %s43 = sphi 0, %s45
      %s46 = sphi 0, %s43
      %s47 = sphi 0, %s46
      %s63 = sphi 0, %s47
      %s71 = sphi 0, %s73
      %s74 = sphi 0, %s71
      %s75 = sphi 0, %s74
      %s91 = sphi 0, %s75
      %s95 = sphi 0, %s95
      %s97 = sphi 0, %s95
      %s98 = sphi 0, %s97
      %s112 = sphi 0, %s98
      %s116 = sphi 0, %s116
      %s118 = sphi 0, %s116
      %s119 = sphi 0, %s118
      %s133 = sphi 0, %s119
      %s137 = sphi 0, %s137
      %s139 = sphi 0, %s137
      %s140 = sphi 0, %s139
      %s154 = sphi 0, %s140
      %s158 = sphi 0, %s158
      %s160 = sphi 0, %s158
      %s161 = sphi 0, %s160
      %s175 = sphi 0, %s161
      %s179 = sphi 0, %s179
      %s181 = sphi 0, %s179
      %s182 = sphi 0, %s181
      %s196 = sphi 0, %s182
      %s204 = sphi 0, %s206
      %s207 = sphi 0, %s204
      %s208 = sphi 0, %s207
      %s224 = sphi 0, %s208
    $region4: #{tpu_custom_call.1} parent=1 // loop_header_branch
      %22 = sbr.rel (%p20) target = $region8
    $region5: #{tpu_custom_call.1} parent=1 // loop_body
      %s24 = ssub.s32 %s19, 1
      %s25 = ssub.s32 %s19, 2
      %s32 = sadd.s32 1, %s27
      %p33 = scmp.ge.s32.totalorder %s32, 1
      %s34 = scalar_select %p33, 0, %s32
      %s35 = sadd.s32 1, %s26
      %s36 = scalar_select %p33, %s35, %s26
      %p37 = scmp.ge.s32.totalorder %s36, 2
      %s38 = scalar_select %p37, 0, %s36
      %s39 = ssub.s32 %s26, %s38
      %s40 = ssub.s32 %s27, %s34
      %s41 = sor.u32 %s39, %s40
      %p42 = scmp.eq.s32.totalorder %s41, 0
      %s44 = sadd.s32 %s43, 1
      %s45 = scalar_select %p42, %s43, %s44
      %p48 = pneg %p42
      %p49 = scmp.eq.s32.totalorder %s19, 1
      %p50 = por %p48, %p49
      %p51 = scmp.ne.s32.totalorder %s43, %s46
      %p52 = scmp.eq.s32.totalorder %s19, 0
      %p53 = por %p51, %p52
      %p54 = scmp.ne.s32.totalorder %s43, %s46
      %p55 = scmp.eq.s32.totalorder %s24, 1
      %p56 = por %p54, %p55
      %p57 = scmp.ne.s32.totalorder %s46, %s47
      %p58 = scmp.eq.s32.totalorder %s24, 0
      %p59 = por %p57, %p58
      %p60 = scmp.ne.s32.totalorder %s46, %s47
      %p61 = scmp.eq.s32.totalorder %s25, 1
      %p62 = por %p60, %p61
      %p64 = scmp.ne.s32.totalorder %s47, %s63
      %p65 = scmp.eq.s32.totalorder %s25, 0
      %p66 = por %p64, %p65
      %s67 = ssub.s32 %s26, %s38
      %s68 = ssub.s32 %s27, %s34
      %s69 = sor.u32 %s67, %s68
      %p70 = scmp.eq.s32.totalorder %s69, 0
      %s72 = sadd.s32 %s71, 1
      %s73 = scalar_select %p70, %s71, %s72
      %p76 = pneg %p70
      %p77 = scmp.eq.s32.totalorder %s19, 1
      %p78 = por %p76, %p77
      %p79 = scmp.ne.s32.totalorder %s71, %s74
      %p80 = scmp.eq.s32.totalorder %s19, 0
      %p81 = por %p79, %p80
      %p82 = scmp.ne.s32.totalorder %s71, %s74
      %p83 = scmp.eq.s32.totalorder %s24, 1
      %p84 = por %p82, %p83
      %p85 = scmp.ne.s32.totalorder %s74, %s75
      %p86 = scmp.eq.s32.totalorder %s24, 0
      %p87 = por %p85, %p86
      %p88 = scmp.ne.s32.totalorder %s74, %s75
      %p89 = scmp.eq.s32.totalorder %s25, 1
      %p90 = por %p88, %p89
      %p92 = scmp.ne.s32.totalorder %s75, %s91
      %p93 = scmp.eq.s32.totalorder %s25, 0
      %p94 = por %p92, %p93
      %s96 = sadd.s32 %s95, 1
      %p99 = scmp.eq.s32.totalorder %s19, 1
      %p100 = scmp.ne.s32.totalorder %s95, %s97
      %p101 = scmp.eq.s32.totalorder %s19, 0
      %p102 = por %p100, %p101
      %p103 = scmp.ne.s32.totalorder %s95, %s97
      %p104 = scmp.eq.s32.totalorder %s24, 1
      %p105 = por %p103, %p104
      %p106 = scmp.ne.s32.totalorder %s97, %s98
      %p107 = scmp.eq.s32.totalorder %s24, 0
      %p108 = por %p106, %p107
      %p109 = scmp.ne.s32.totalorder %s97, %s98
      %p110 = scmp.eq.s32.totalorder %s25, 1
      %p111 = por %p109, %p110
      %p113 = scmp.ne.s32.totalorder %s98, %s112
      %p114 = scmp.eq.s32.totalorder %s25, 0
      %p115 = por %p113, %p114
      %s117 = sadd.s32 %s116, 1
      %p120 = scmp.eq.s32.totalorder %s19, 1
      %p121 = scmp.ne.s32.totalorder %s116, %s118
      %p122 = scmp.eq.s32.totalorder %s19, 0
      %p123 = por %p121, %p122
      %p124 = scmp.ne.s32.totalorder %s116, %s118
      %p125 = scmp.eq.s32.totalorder %s24, 1
      %p126 = por %p124, %p125
      %p127 = scmp.ne.s32.totalorder %s118, %s119
      %p128 = scmp.eq.s32.totalorder %s24, 0
      %p129 = por %p127, %p128
      %p130 = scmp.ne.s32.totalorder %s118, %s119
      %p131 = scmp.eq.s32.totalorder %s25, 1
      %p132 = por %p130, %p131
      %p134 = scmp.ne.s32.totalorder %s119, %s133
      %p135 = scmp.eq.s32.totalorder %s25, 0
      %p136 = por %p134, %p135
      %s138 = sadd.s32 %s137, 1
      %p141 = scmp.eq.s32.totalorder %s19, 1
      %p142 = scmp.ne.s32.totalorder %s137, %s139
      %p143 = scmp.eq.s32.totalorder %s19, 0
      %p144 = por %p142, %p143
      %p145 = scmp.ne.s32.totalorder %s137, %s139
      %p146 = scmp.eq.s32.totalorder %s24, 1
      %p147 = por %p145, %p146
      %p148 = scmp.ne.s32.totalorder %s139, %s140
      %p149 = scmp.eq.s32.totalorder %s24, 0
      %p150 = por %p148, %p149
      %p151 = scmp.ne.s32.totalorder %s139, %s140
      %p152 = scmp.eq.s32.totalorder %s25, 1
      %p153 = por %p151, %p152
      %p155 = scmp.ne.s32.totalorder %s140, %s154
      %p156 = scmp.eq.s32.totalorder %s25, 0
      %p157 = por %p155, %p156
      %s159 = sadd.s32 %s158, 1
      %p162 = scmp.eq.s32.totalorder %s19, 1
      %p163 = scmp.ne.s32.totalorder %s158, %s160
      %p164 = scmp.eq.s32.totalorder %s19, 0
      %p165 = por %p163, %p164
      %p166 = scmp.ne.s32.totalorder %s158, %s160
      %p167 = scmp.eq.s32.totalorder %s24, 1
      %p168 = por %p166, %p167
      %p169 = scmp.ne.s32.totalorder %s160, %s161
      %p170 = scmp.eq.s32.totalorder %s24, 0
      %p171 = por %p169, %p170
      %p172 = scmp.ne.s32.totalorder %s160, %s161
      %p173 = scmp.eq.s32.totalorder %s25, 1
      %p174 = por %p172, %p173
      %p176 = scmp.ne.s32.totalorder %s161, %s175
      %p177 = scmp.eq.s32.totalorder %s25, 0
      %p178 = por %p176, %p177
      %s180 = sadd.s32 %s179, 1
      %p183 = scmp.eq.s32.totalorder %s19, 1
      %p184 = scmp.ne.s32.totalorder %s179, %s181
      %p185 = scmp.eq.s32.totalorder %s19, 0
      %p186 = por %p184, %p185
      %p187 = scmp.ne.s32.totalorder %s179, %s181
      %p188 = scmp.eq.s32.totalorder %s24, 1
      %p189 = por %p187, %p188
      %p190 = scmp.ne.s32.totalorder %s181, %s182
      %p191 = scmp.eq.s32.totalorder %s24, 0
      %p192 = por %p190, %p191
      %p193 = scmp.ne.s32.totalorder %s181, %s182
      %p194 = scmp.eq.s32.totalorder %s25, 1
      %p195 = por %p193, %p194
      %p197 = scmp.ne.s32.totalorder %s182, %s196
      %p198 = scmp.eq.s32.totalorder %s25, 0
      %p199 = por %p197, %p198
      %s200 = ssub.s32 %s26, %s38
      %s201 = ssub.s32 %s27, %s34
      %s202 = sor.u32 %s200, %s201
      %p203 = scmp.eq.s32.totalorder %s202, 0
      %s205 = sadd.s32 %s204, 1
      %s206 = scalar_select %p203, %s204, %s205
      %p209 = pneg %p203
      %p210 = scmp.eq.s32.totalorder %s19, 1
      %p211 = por %p209, %p210
      %p212 = scmp.ne.s32.totalorder %s204, %s207
      %p213 = scmp.eq.s32.totalorder %s19, 0
      %p214 = por %p212, %p213
      %p215 = scmp.ne.s32.totalorder %s204, %s207
      %p216 = scmp.eq.s32.totalorder %s24, 1
      %p217 = por %p215, %p216
      %p218 = scmp.ne.s32.totalorder %s207, %s208
      %p219 = scmp.eq.s32.totalorder %s24, 0
      %p220 = por %p218, %p219
      %p221 = scmp.ne.s32.totalorder %s207, %s208
      %p222 = scmp.eq.s32.totalorder %s25, 1
      %p223 = por %p221, %p222
      %p225 = scmp.ne.s32.totalorder %s208, %s224
      %p226 = scmp.eq.s32.totalorder %s25, 0
      %p227 = por %p225, %p226
      %p228 = scmp.le.s32.totalorder 1, %s19
      %p229 = scmp.lt.s32.totalorder %s19, 3
      %p230 = pnand %p228, %p229
      %p231 = pneg %p230
      // Predicated region
      $region9: #{tpu_custom_call.1} parent=5 // pred_check
        _
      $region10: #{tpu_custom_call.1} parent=5 // pred_check_branch
        %233 = sbr.rel (%p230) target = $region12
      $region11: #{tpu_custom_call.1} parent=5 // pred_region
        %s234 = ssub.s32 %s19, 1
        // Predicated region
        $region13: #{tpu_custom_call.1} parent=11 // pred_check
          %p235 = pneg %p108
        $region14: #{tpu_custom_call.1} parent=11 // pred_check_branch
          %237 = sbr.rel (%p235) target = $region16
        $region15: #{tpu_custom_call.1} parent=11 // pred_region
          _
        $region16: #{tpu_custom_call.1} parent=11 // pred_fallthru
          _
        // Predicated region
        $region17: #{tpu_custom_call.1} parent=11 // pred_check
          %p238 = pneg %p129
        $region18: #{tpu_custom_call.1} parent=11 // pred_check_branch
          %240 = sbr.rel (%p238) target = $region20
        $region19: #{tpu_custom_call.1} parent=11 // pred_region
          _
        $region20: #{tpu_custom_call.1} parent=11 // pred_fallthru
          _
        // Predicated region
        $region21: #{tpu_custom_call.1} parent=11 // pred_check
          %p241 = pneg %p150
        $region22: #{tpu_custom_call.1} parent=11 // pred_check_branch
          %243 = sbr.rel (%p241) target = $region24
        $region23: #{tpu_custom_call.1} parent=11 // pred_region
          _
        $region24: #{tpu_custom_call.1} parent=11 // pred_fallthru
          _
        // Predicated region
        $region25: #{tpu_custom_call.1} parent=11 // pred_check
          %p244 = pneg %p171
        $region26: #{tpu_custom_call.1} parent=11 // pred_check_branch
          %246 = sbr.rel (%p244) target = $region28
        $region27: #{tpu_custom_call.1} parent=11 // pred_region
          _
        $region28: #{tpu_custom_call.1} parent=11 // pred_fallthru
          _
        // Predicated region
        $region29: #{tpu_custom_call.1} parent=11 // pred_check
          %p247 = pneg %p192
        $region30: #{tpu_custom_call.1} parent=11 // pred_check_branch
          %249 = sbr.rel (%p247) target = $region32
        $region31: #{tpu_custom_call.1} parent=11 // pred_region
          _
        $region32: #{tpu_custom_call.1} parent=11 // pred_fallthru
          _
      $region12: #{tpu_custom_call.1} parent=5 // pred_fallthru
        _
      %p250 = scmp.lt.s32.totalorder %s19, 2
      // Predicated region
      $region33: #{tpu_custom_call.1} parent=5 // pred_check
        %p251 = pneg %p250
      $region34: #{tpu_custom_call.1} parent=5 // pred_check_branch
        %253 = sbr.rel (%p251) target = $region36
      $region35: #{tpu_custom_call.1} parent=5 // pred_region
        // Predicated region
        $region37: #{tpu_custom_call.1} parent=35 // pred_check
          %p254 = pneg %p53
        $region38: #{tpu_custom_call.1} parent=35 // pred_check_branch
          %256 = sbr.rel (%p254) target = $region40
        $region39: #{tpu_custom_call.1} parent=35 // pred_region
          %s257 = smul.u32 16, %s27
          %p258 = scmp.lt.s32.totalorder %s26, 1
          %s259 = scalar_select %p258, %s26, 1
          %p260 = scmp.lt.s32.totalorder %s257, 15
          %s261 = scalar_select %p260, %s257, 15
          %s262 = smul.addr %s261, 2
          %s263 = smul.addr %s259, 32
          %s264 = sadd.s32 %s262, %s263
          %s265 = smul.addr %s264, 4
          %s266 = scalar_lea.vmem %s0, %s265
          %s267 = smul.u32 16, %s27
        $region40: #{tpu_custom_call.1} parent=35 // pred_fallthru
          _
        // Predicated region
        $region41: #{tpu_custom_call.1} parent=35 // pred_check
          %p268 = pneg %p81
        $region42: #{tpu_custom_call.1} parent=35 // pred_check_branch
          %270 = sbr.rel (%p268) target = $region44
        $region43: #{tpu_custom_call.1} parent=35 // pred_region
          %s271 = sand.u32 %s71, 1
          %s272 = scalar_lea.sflag [#allocation3], %s271
          %s273 = sand.u32 %s71, 1
          %s274 = smul.addr %s273, 256
          %s275 = scalar_lea.vmem [#allocation2], %s274
          %s276 = smul.u32 16, %s27
          %s278 = ssub.s32 4096, 4096
          %279 = vsyncadd %s272, %s278
          %s280 = smul.addr %s276, 4
          %s281 = smul.addr %s26, 64
          %s282 = sadd.s32 %s280, %s281
          %s283 = smul.addr %s282, 64
          %s284 = scalar_lea.hbm %s1, %s283
          %s285 = sshll.u32 %s275, 4
          %s286 = int_to_ptr.vmem [resolvable:$true] %s285
          %291 = dma.hbm_to_vmem [thread:$0]  %s284, 4096, %s286, %s272, 64, 64, 4
        $region44: #{tpu_custom_call.1} parent=35 // pred_fallthru
          _
      $region36: #{tpu_custom_call.1} parent=5 // pred_fallthru
        _
      %p292 = scmp.le.s32.totalorder 1, %s19
      %p293 = scmp.lt.s32.totalorder %s19, 3
      %p294 = pnand %p292, %p293
      %p295 = pneg %p294
      // Predicated region
      $region45: #{tpu_custom_call.1} parent=5 // pred_check
        _
      $region46: #{tpu_custom_call.1} parent=5 // pred_check_branch
        %297 = sbr.rel (%p294) target = $region48
      $region47: #{tpu_custom_call.1} parent=5 // pred_region
        %s298 = ssub.s32 %s19, 1
        %s299 = sand.u32 %s74, 1
        %s300 = scalar_lea.sflag [#allocation3], %s299
        %s301 = sand.u32 %s74, 1
        %s302 = smul.addr %s301, 256
        %s303 = scalar_lea.vmem [#allocation2], %s302
        // Predicated region
        $region49: #{tpu_custom_call.1} parent=47 // pred_check
          %p304 = pneg %p87
        $region50: #{tpu_custom_call.1} parent=47 // pred_check_branch
          %306 = sbr.rel (%p304) target = $region52
        $region51: #{tpu_custom_call.1} parent=47 // pred_region
          %307 = dma.done %s300, 4096
        $region52: #{tpu_custom_call.1} parent=47 // pred_fallthru
          _
        %s308 = smul.u32 16, %s29
        %p309 = scmp.lt.s32.totalorder %s28, 1
        %s310 = scalar_select %p309, %s28, 1
        %p311 = scmp.lt.s32.totalorder %s308, 15
        %s312 = scalar_select %p311, %s308, 15
        %s313 = smul.addr %s312, 2
        %s314 = smul.addr %s310, 32
        %s315 = sadd.s32 %s313, %s314
        %s316 = smul.addr %s315, 4
        %s317 = scalar_lea.vmem %s0, %s316
        %p318 = pneg %p59
        %p319 = pneg %p56
        %s320 = sand.u32 %s74, 1
        %s321 = scalar_lea.sflag [#allocation3], %s320
        %s322 = sand.u32 %s74, 1
        %s323 = smul.addr %s322, 256
        %s324 = scalar_lea.vmem [#allocation2], %s323
        %p325 = pneg %p87
        %p326 = pneg %p84
        %p327 = pneg %p108
        %p328 = pneg %p105
        %p329 = pneg %p129
        %p330 = pneg %p126
        %p331 = pneg %p150
        %p332 = pneg %p147
        %p333 = pneg %p171
        %p334 = pneg %p168
        %p335 = pneg %p192
        %p336 = pneg %p189
        %p337 = pneg %p220
        %p338 = pneg %p217
        %s339 = sand.u32 %s207, 1
        %s340 = scalar_lea.sflag [#allocation4], %s339
        %s341 = sand.u32 %s207, 1
        %s342 = smul.addr %s341, 256
        %s343 = scalar_lea.vmem [#allocation5], %s342
        %s344 = smul.u32 16, %s29
        %p345 = scmp.lt.s32.totalorder %s28, 1
        %s346 = scalar_select %p345, %s28, 1
        %p347 = scmp.lt.s32.totalorder %s344, 15
        %s348 = scalar_select %p347, %s344, 15
        %s349 = smul.addr %s348, 2
        %s350 = smul.addr %s346, 32
        %s351 = sadd.s32 %s349, %s350
        %s352 = smul.addr %s351, 4
        %s353 = scalar_lea.vmem %s0, %s352
        %s354 = smul.u32 16, %s29
        %s355 = smul.u32 16, %s29
        %s356 = smul.u32 16, %s29
        %v358 = vld [vmem:[%s353] sm:$0xf]
        %v359 = vld [vmem:[%s353 + $0x4] sm:$0xf]
        %v360 = vld [vmem:[%s353 + $0x8] sm:$0xf]
        %v361 = vld [vmem:[%s353 + $0xc] sm:$0xf]
        %v362 = vld [vmem:[%s353 + $0x10] sm:$0xf]
        %v363 = vld [vmem:[%s353 + $0x14] sm:$0xf]
        %v364 = vld [vmem:[%s353 + $0x18] sm:$0xf]
        %v365 = vld [vmem:[%s353 + $0x1c] sm:$0xf]
        %v366 = vld [vmem:[%s353 + $0x20] sm:$0xf]
        %v367 = vld [vmem:[%s353 + $0x24] sm:$0xf]
        %v368 = vld [vmem:[%s353 + $0x28] sm:$0xf]
        %v369 = vld [vmem:[%s353 + $0x2c] sm:$0xf]
        %v370 = vld [vmem:[%s353 + $0x30] sm:$0xf]
        %v371 = vld [vmem:[%s353 + $0x34] sm:$0xf]
        %v372 = vld [vmem:[%s353 + $0x38] sm:$0xf]
        %v373 = vld [vmem:[%s353 + $0x3c] sm:$0xf]
        %v374 = vld [vmem:[%s353 + $0x40] sm:$0xf]
        %v375 = vld [vmem:[%s353 + $0x44] sm:$0xf]
        %v376 = vld [vmem:[%s353 + $0x48] sm:$0xf]
        %v377 = vld [vmem:[%s353 + $0x4c] sm:$0xf]
        %v378 = vld [vmem:[%s353 + $0x50] sm:$0xf]
        %v379 = vld [vmem:[%s353 + $0x54] sm:$0xf]
        %v380 = vld [vmem:[%s353 + $0x58] sm:$0xf]
        %v381 = vld [vmem:[%s353 + $0x5c] sm:$0xf]
        %v382 = vld [vmem:[%s353 + $0x60] sm:$0xf]
        %v383 = vld [vmem:[%s353 + $0x64] sm:$0xf]
        %v384 = vld [vmem:[%s353 + $0x68] sm:$0xf]
        %v385 = vld [vmem:[%s353 + $0x6c] sm:$0xf]
        %v386 = vld [vmem:[%s353 + $0x70] sm:$0xf]
        %v387 = vld [vmem:[%s353 + $0x74] sm:$0xf]
        %v388 = vld [vmem:[%s353 + $0x78] sm:$0xf]
        %v389 = vld [vmem:[%s353 + $0x7c] sm:$0xf]
        %v390 = vunpack.c.l.bf16 %v358
        %v391 = vunpack.c.l.bf16 %v359
        %v392 = vunpack.c.l.bf16 %v360
        %v393 = vunpack.c.l.bf16 %v361
        %v394 = vunpack.c.l.bf16 %v362
        %v395 = vunpack.c.l.bf16 %v363
        %v396 = vunpack.c.l.bf16 %v364
        %v397 = vunpack.c.l.bf16 %v365
        %v398 = vunpack.c.l.bf16 %v366
        %v399 = vunpack.c.l.bf16 %v367
        %v400 = vunpack.c.l.bf16 %v368
        %v401 = vunpack.c.l.bf16 %v369
        %v402 = vunpack.c.l.bf16 %v370
        %v403 = vunpack.c.l.bf16 %v371
        %v404 = vunpack.c.l.bf16 %v372
        %v405 = vunpack.c.l.bf16 %v373
        %v406 = vunpack.c.l.bf16 %v374
        %v407 = vunpack.c.l.bf16 %v375
        %v408 = vunpack.c.l.bf16 %v376
        %v409 = vunpack.c.l.bf16 %v377
        %v410 = vunpack.c.l.bf16 %v378
        %v411 = vunpack.c.l.bf16 %v379
        %v412 = vunpack.c.l.bf16 %v380
        %v413 = vunpack.c.l.bf16 %v381
        %v414 = vunpack.c.l.bf16 %v382
        %v415 = vunpack.c.l.bf16 %v383
        %v416 = vunpack.c.l.bf16 %v384
        %v417 = vunpack.c.l.bf16 %v385
        %v418 = vunpack.c.l.bf16 %v386
        %v419 = vunpack.c.l.bf16 %v387
        %v420 = vunpack.c.l.bf16 %v388
        %v421 = vunpack.c.l.bf16 %v389
        %vm422 = vcmask 31744
        %v423 = vsel %vm422, %v390, 0.0
        %424 = vadd.xlane.f32.xlu0 %v423
        %v425 = vpop.xlane.xlu0 %424
        %v426 = vsel %vm422, %v391, 0.0
        %427 = vadd.xlane.f32.xlu0 %v426
        %v428 = vpop.xlane.xlu0 %427
        %v429 = vsel %vm422, %v392, 0.0
        %430 = vadd.xlane.f32.xlu0 %v429
        %v431 = vpop.xlane.xlu0 %430
        %v432 = vsel %vm422, %v393, 0.0
        %433 = vadd.xlane.f32.xlu0 %v432
        %v434 = vpop.xlane.xlu0 %433
        %v435 = vsel %vm422, %v394, 0.0
        %436 = vadd.xlane.f32.xlu0 %v435
        %v437 = vpop.xlane.xlu0 %436
        %v438 = vsel %vm422, %v395, 0.0
        %439 = vadd.xlane.f32.xlu0 %v438
        %v440 = vpop.xlane.xlu0 %439
        %v441 = vsel %vm422, %v396, 0.0
        %442 = vadd.xlane.f32.xlu0 %v441
        %v443 = vpop.xlane.xlu0 %442
        %v444 = vsel %vm422, %v397, 0.0
        %445 = vadd.xlane.f32.xlu0 %v444
        %v446 = vpop.xlane.xlu0 %445
        %v447 = vsel %vm422, %v398, 0.0
        %448 = vadd.xlane.f32.xlu0 %v447
        %v449 = vpop.xlane.xlu0 %448
        %v450 = vsel %vm422, %v399, 0.0
        %451 = vadd.xlane.f32.xlu0 %v450
        %v452 = vpop.xlane.xlu0 %451
        %v453 = vsel %vm422, %v400, 0.0
        %454 = vadd.xlane.f32.xlu0 %v453
        %v455 = vpop.xlane.xlu0 %454
        %v456 = vsel %vm422, %v401, 0.0
        %457 = vadd.xlane.f32.xlu0 %v456
        %v458 = vpop.xlane.xlu0 %457
        %v459 = vsel %vm422, %v402, 0.0
        %460 = vadd.xlane.f32.xlu0 %v459
        %v461 = vpop.xlane.xlu0 %460
        %v462 = vsel %vm422, %v403, 0.0
        %463 = vadd.xlane.f32.xlu0 %v462
        %v464 = vpop.xlane.xlu0 %463
        %v465 = vsel %vm422, %v404, 0.0
        %466 = vadd.xlane.f32.xlu0 %v465
        %v467 = vpop.xlane.xlu0 %466
        %v468 = vsel %vm422, %v405, 0.0
        %469 = vadd.xlane.f32.xlu0 %v468
        %v470 = vpop.xlane.xlu0 %469
        %v471 = vsel %vm422, %v406, 0.0
        %472 = vadd.xlane.f32.xlu0 %v471
        %v473 = vpop.xlane.xlu0 %472
        %v474 = vsel %vm422, %v407, 0.0
        %475 = vadd.xlane.f32.xlu0 %v474
        %v476 = vpop.xlane.xlu0 %475
        %v477 = vsel %vm422, %v408, 0.0
        %478 = vadd.xlane.f32.xlu0 %v477
        %v479 = vpop.xlane.xlu0 %478
        %v480 = vsel %vm422, %v409, 0.0
        %481 = vadd.xlane.f32.xlu0 %v480
        %v482 = vpop.xlane.xlu0 %481
        %v483 = vsel %vm422, %v410, 0.0
        %484 = vadd.xlane.f32.xlu0 %v483
        %v485 = vpop.xlane.xlu0 %484
        %v486 = vsel %vm422, %v411, 0.0
        %487 = vadd.xlane.f32.xlu0 %v486
        %v488 = vpop.xlane.xlu0 %487
        %v489 = vsel %vm422, %v412, 0.0
        %490 = vadd.xlane.f32.xlu0 %v489
        %v491 = vpop.xlane.xlu0 %490
        %v492 = vsel %vm422, %v413, 0.0
        %493 = vadd.xlane.f32.xlu0 %v492
        %v494 = vpop.xlane.xlu0 %493
        %v495 = vsel %vm422, %v414, 0.0
        %496 = vadd.xlane.f32.xlu0 %v495
        %v497 = vpop.xlane.xlu0 %496
        %v498 = vsel %vm422, %v415, 0.0
        %499 = vadd.xlane.f32.xlu0 %v498
        %v500 = vpop.xlane.xlu0 %499
        %v501 = vsel %vm422, %v416, 0.0
        %502 = vadd.xlane.f32.xlu0 %v501
        %v503 = vpop.xlane.xlu0 %502
        %v504 = vsel %vm422, %v417, 0.0
        %505 = vadd.xlane.f32.xlu0 %v504
        %v506 = vpop.xlane.xlu0 %505
        %v507 = vsel %vm422, %v418, 0.0
        %508 = vadd.xlane.f32.xlu0 %v507
        %v509 = vpop.xlane.xlu0 %508
        %v510 = vsel %vm422, %v419, 0.0
        %511 = vadd.xlane.f32.xlu0 %v510
        %v512 = vpop.xlane.xlu0 %511
        %v513 = vsel %vm422, %v420, 0.0
        %514 = vadd.xlane.f32.xlu0 %v513
        %v515 = vpop.xlane.xlu0 %514
        %v516 = vsel %vm422, %v421, 0.0
        %517 = vadd.xlane.f32.xlu0 %v516
        %v518 = vpop.xlane.xlu0 %517
        %v519 = vrcp.pop 4.0
        %v520 = vmul.f32 %v425, %v519
        %v521 = vmul.f32 %v428, %v519
        %v522 = vmul.f32 %v431, %v519
        %v523 = vmul.f32 %v434, %v519
        %v524 = vmul.f32 %v437, %v519
        %v525 = vmul.f32 %v440, %v519
        %v526 = vmul.f32 %v443, %v519
        %v527 = vmul.f32 %v446, %v519
        %v528 = vmul.f32 %v449, %v519
        %v529 = vmul.f32 %v452, %v519
        %v530 = vmul.f32 %v455, %v519
        %v531 = vmul.f32 %v458, %v519
        %v532 = vmul.f32 %v461, %v519
        %v533 = vmul.f32 %v464, %v519
        %v534 = vmul.f32 %v467, %v519
        %v535 = vmul.f32 %v470, %v519
        %v536 = vmul.f32 %v473, %v519
        %v537 = vmul.f32 %v476, %v519
        %v538 = vmul.f32 %v479, %v519
        %v539 = vmul.f32 %v482, %v519
        %v540 = vmul.f32 %v485, %v519
        %v541 = vmul.f32 %v488, %v519
        %v542 = vmul.f32 %v491, %v519
        %v543 = vmul.f32 %v494, %v519
        %v544 = vmul.f32 %v497, %v519
        %v545 = vmul.f32 %v500, %v519
        %v546 = vmul.f32 %v503, %v519
        %v547 = vmul.f32 %v506, %v519
        %v548 = vmul.f32 %v509, %v519
        %v549 = vmul.f32 %v512, %v519
        %v550 = vmul.f32 %v515, %v519
        %v551 = vmul.f32 %v518, %v519
        %v552 = vsub.f32 %v390, %v520
        %v553 = vsub.f32 %v391, %v521
        %v554 = vsub.f32 %v392, %v522
        %v555 = vsub.f32 %v393, %v523
        %v556 = vsub.f32 %v394, %v524
        %v557 = vsub.f32 %v395, %v525
        %v558 = vsub.f32 %v396, %v526
        %v559 = vsub.f32 %v397, %v527
        %v560 = vsub.f32 %v398, %v528
        %v561 = vsub.f32 %v399, %v529
        %v562 = vsub.f32 %v400, %v530
        %v563 = vsub.f32 %v401, %v531
        %v564 = vsub.f32 %v402, %v532
        %v565 = vsub.f32 %v403, %v533
        %v566 = vsub.f32 %v404, %v534
        %v567 = vsub.f32 %v405, %v535
        %v568 = vsub.f32 %v406, %v536
        %v569 = vsub.f32 %v407, %v537
        %v570 = vsub.f32 %v408, %v538
        %v571 = vsub.f32 %v409, %v539
        %v572 = vsub.f32 %v410, %v540
        %v573 = vsub.f32 %v411, %v541
        %v574 = vsub.f32 %v412, %v542
        %v575 = vsub.f32 %v413, %v543
        %v576 = vsub.f32 %v414, %v544
        %v577 = vsub.f32 %v415, %v545
        %v578 = vsub.f32 %v416, %v546
        %v579 = vsub.f32 %v417, %v547
        %v580 = vsub.f32 %v418, %v548
        %v581 = vsub.f32 %v419, %v549
        %v582 = vsub.f32 %v420, %v550
        %v583 = vsub.f32 %v421, %v551
        %v584 = vmul.f32 %v552, %v552
        %v585 = vmul.f32 %v553, %v553
        %v586 = vmul.f32 %v554, %v554
        %v587 = vmul.f32 %v555, %v555
        %v588 = vmul.f32 %v556, %v556
        %v589 = vmul.f32 %v557, %v557
        %v590 = vmul.f32 %v558, %v558
        %v591 = vmul.f32 %v559, %v559
        %v592 = vmul.f32 %v560, %v560
        %v593 = vmul.f32 %v561, %v561
        %v594 = vmul.f32 %v562, %v562
        %v595 = vmul.f32 %v563, %v563
        %v596 = vmul.f32 %v564, %v564
        %v597 = vmul.f32 %v565, %v565
        %v598 = vmul.f32 %v566, %v566
        %v599 = vmul.f32 %v567, %v567
        %v600 = vmul.f32 %v568, %v568
        %v601 = vmul.f32 %v569, %v569
        %v602 = vmul.f32 %v570, %v570
        %v603 = vmul.f32 %v571, %v571
        %v604 = vmul.f32 %v572, %v572
        %v605 = vmul.f32 %v573, %v573
        %v606 = vmul.f32 %v574, %v574
        %v607 = vmul.f32 %v575, %v575
        %v608 = vmul.f32 %v576, %v576
        %v609 = vmul.f32 %v577, %v577
        %v610 = vmul.f32 %v578, %v578
        %v611 = vmul.f32 %v579, %v579
        %v612 = vmul.f32 %v580, %v580
        %v613 = vmul.f32 %v581, %v581
        %v614 = vmul.f32 %v582, %v582
        %v615 = vmul.f32 %v583, %v583
        %v616 = vsel %vm422, %v584, 0.0
        %617 = vadd.xlane.f32.xlu0 %v616
        %v618 = vpop.xlane.xlu0 %617
        %v619 = vsel %vm422, %v585, 0.0
        %620 = vadd.xlane.f32.xlu0 %v619
        %v621 = vpop.xlane.xlu0 %620
        %v622 = vsel %vm422, %v586, 0.0
        %623 = vadd.xlane.f32.xlu0 %v622
        %v624 = vpop.xlane.xlu0 %623
        %v625 = vsel %vm422, %v587, 0.0
        %626 = vadd.xlane.f32.xlu0 %v625
        %v627 = vpop.xlane.xlu0 %626
        %v628 = vsel %vm422, %v588, 0.0
        %629 = vadd.xlane.f32.xlu0 %v628
        %v630 = vpop.xlane.xlu0 %629
        %v631 = vsel %vm422, %v589, 0.0
        %632 = vadd.xlane.f32.xlu0 %v631
        %v633 = vpop.xlane.xlu0 %632
        %v634 = vsel %vm422, %v590, 0.0
        %635 = vadd.xlane.f32.xlu0 %v634
        %v636 = vpop.xlane.xlu0 %635
        %v637 = vsel %vm422, %v591, 0.0
        %638 = vadd.xlane.f32.xlu0 %v637
        %v639 = vpop.xlane.xlu0 %638
        %v640 = vsel %vm422, %v592, 0.0
        %641 = vadd.xlane.f32.xlu0 %v640
        %v642 = vpop.xlane.xlu0 %641
        %v643 = vsel %vm422, %v593, 0.0
        %644 = vadd.xlane.f32.xlu0 %v643
        %v645 = vpop.xlane.xlu0 %644
        %v646 = vsel %vm422, %v594, 0.0
        %647 = vadd.xlane.f32.xlu0 %v646
        %v648 = vpop.xlane.xlu0 %647
        %v649 = vsel %vm422, %v595, 0.0
        %650 = vadd.xlane.f32.xlu0 %v649
        %v651 = vpop.xlane.xlu0 %650
        %v652 = vsel %vm422, %v596, 0.0
        %653 = vadd.xlane.f32.xlu0 %v652
        %v654 = vpop.xlane.xlu0 %653
        %v655 = vsel %vm422, %v597, 0.0
        %656 = vadd.xlane.f32.xlu0 %v655
        %v657 = vpop.xlane.xlu0 %656
        %v658 = vsel %vm422, %v598, 0.0
        %659 = vadd.xlane.f32.xlu0 %v658
        %v660 = vpop.xlane.xlu0 %659
        %v661 = vsel %vm422, %v599, 0.0
        %662 = vadd.xlane.f32.xlu0 %v661
        %v663 = vpop.xlane.xlu0 %662
        %v664 = vsel %vm422, %v600, 0.0
        %665 = vadd.xlane.f32.xlu0 %v664
        %v666 = vpop.xlane.xlu0 %665
        %v667 = vsel %vm422, %v601, 0.0
        %668 = vadd.xlane.f32.xlu0 %v667
        %v669 = vpop.xlane.xlu0 %668
        %v670 = vsel %vm422, %v602, 0.0
        %671 = vadd.xlane.f32.xlu0 %v670
        %v672 = vpop.xlane.xlu0 %671
        %v673 = vsel %vm422, %v603, 0.0
        %674 = vadd.xlane.f32.xlu0 %v673
        %v675 = vpop.xlane.xlu0 %674
        %v676 = vsel %vm422, %v604, 0.0
        %677 = vadd.xlane.f32.xlu0 %v676
        %v678 = vpop.xlane.xlu0 %677
        %v679 = vsel %vm422, %v605, 0.0
        %680 = vadd.xlane.f32.xlu0 %v679
        %v681 = vpop.xlane.xlu0 %680
        %v682 = vsel %vm422, %v606, 0.0
        %683 = vadd.xlane.f32.xlu0 %v682
        %v684 = vpop.xlane.xlu0 %683
        %v685 = vsel %vm422, %v607, 0.0
        %686 = vadd.xlane.f32.xlu0 %v685
        %v687 = vpop.xlane.xlu0 %686
        %v688 = vsel %vm422, %v608, 0.0
        %689 = vadd.xlane.f32.xlu0 %v688
        %v690 = vpop.xlane.xlu0 %689
        %v691 = vsel %vm422, %v609, 0.0
        %692 = vadd.xlane.f32.xlu0 %v691
        %v693 = vpop.xlane.xlu0 %692
        %v694 = vsel %vm422, %v610, 0.0
        %695 = vadd.xlane.f32.xlu0 %v694
        %v696 = vpop.xlane.xlu0 %695
        %v697 = vsel %vm422, %v611, 0.0
        %698 = vadd.xlane.f32.xlu0 %v697
        %v699 = vpop.xlane.xlu0 %698
        %v700 = vsel %vm422, %v612, 0.0
        %701 = vadd.xlane.f32.xlu0 %v700
        %v702 = vpop.xlane.xlu0 %701
        %v703 = vsel %vm422, %v613, 0.0
        %704 = vadd.xlane.f32.xlu0 %v703
        %v705 = vpop.xlane.xlu0 %704
        %v706 = vsel %vm422, %v614, 0.0
        %707 = vadd.xlane.f32.xlu0 %v706
        %v708 = vpop.xlane.xlu0 %707
        %v709 = vsel %vm422, %v615, 0.0
        %710 = vadd.xlane.f32.xlu0 %v709
        %v711 = vpop.xlane.xlu0 %710
        %v712 = vmul.f32 %v618, %v519
        %v713 = vmul.f32 %v621, %v519
        %v714 = vmul.f32 %v624, %v519
        %v715 = vmul.f32 %v627, %v519
        %v716 = vmul.f32 %v630, %v519
        %v717 = vmul.f32 %v633, %v519
        %v718 = vmul.f32 %v636, %v519
        %v719 = vmul.f32 %v639, %v519
        %v720 = vmul.f32 %v642, %v519
        %v721 = vmul.f32 %v645, %v519
        %v722 = vmul.f32 %v648, %v519
        %v723 = vmul.f32 %v651, %v519
        %v724 = vmul.f32 %v654, %v519
        %v725 = vmul.f32 %v657, %v519
        %v726 = vmul.f32 %v660, %v519
        %v727 = vmul.f32 %v663, %v519
        %v728 = vmul.f32 %v666, %v519
        %v729 = vmul.f32 %v669, %v519
        %v730 = vmul.f32 %v672, %v519
        %v731 = vmul.f32 %v675, %v519
        %v732 = vmul.f32 %v678, %v519
        %v733 = vmul.f32 %v681, %v519
        %v734 = vmul.f32 %v684, %v519
        %v735 = vmul.f32 %v687, %v519
        %v736 = vmul.f32 %v690, %v519
        %v737 = vmul.f32 %v693, %v519
        %v738 = vmul.f32 %v696, %v519
        %v739 = vmul.f32 %v699, %v519
        %v740 = vmul.f32 %v702, %v519
        %v741 = vmul.f32 %v705, %v519
        %v742 = vmul.f32 %v708, %v519
        %v743 = vmul.f32 %v711, %v519
        %v744 = vadd.f32 %v712, 1e-06
        %v745 = vadd.f32 %v713, 1e-06
        %v746 = vadd.f32 %v714, 1e-06
        %v747 = vadd.f32 %v715, 1e-06
        %v748 = vadd.f32 %v716, 1e-06
        %v749 = vadd.f32 %v717, 1e-06
        %v750 = vadd.f32 %v718, 1e-06
        %v751 = vadd.f32 %v719, 1e-06
        %v752 = vadd.f32 %v720, 1e-06
        %v753 = vadd.f32 %v721, 1e-06
        %v754 = vadd.f32 %v722, 1e-06
        %v755 = vadd.f32 %v723, 1e-06
        %v756 = vadd.f32 %v724, 1e-06
        %v757 = vadd.f32 %v725, 1e-06
        %v758 = vadd.f32 %v726, 1e-06
        %v759 = vadd.f32 %v727, 1e-06
        %v760 = vadd.f32 %v728, 1e-06
        %v761 = vadd.f32 %v729, 1e-06
        %v762 = vadd.f32 %v730, 1e-06
        %v763 = vadd.f32 %v731, 1e-06
        %v764 = vadd.f32 %v732, 1e-06
        %v765 = vadd.f32 %v733, 1e-06
        %v766 = vadd.f32 %v734, 1e-06
        %v767 = vadd.f32 %v735, 1e-06
        %v768 = vadd.f32 %v736, 1e-06
        %v769 = vadd.f32 %v737, 1e-06
        %v770 = vadd.f32 %v738, 1e-06
        %v771 = vadd.f32 %v739, 1e-06
        %v772 = vadd.f32 %v740, 1e-06
        %v773 = vadd.f32 %v741, 1e-06
        %v774 = vadd.f32 %v742, 1e-06
        %v775 = vadd.f32 %v743, 1e-06
        %v776 = vrsqrt.pop %v744
        %v777 = vrsqrt.pop %v745
        %v778 = vrsqrt.pop %v746
        %v779 = vrsqrt.pop %v747
        %v780 = vrsqrt.pop %v748
        %v781 = vrsqrt.pop %v749
        %v782 = vrsqrt.pop %v750
        %v783 = vrsqrt.pop %v751
        %v784 = vrsqrt.pop %v752
        %v785 = vrsqrt.pop %v753
        %v786 = vrsqrt.pop %v754
        %v787 = vrsqrt.pop %v755
        %v788 = vrsqrt.pop %v756
        %v789 = vrsqrt.pop %v757
        %v790 = vrsqrt.pop %v758
        %v791 = vrsqrt.pop %v759
        %v792 = vrsqrt.pop %v760
        %v793 = vrsqrt.pop %v761
        %v794 = vrsqrt.pop %v762
        %v795 = vrsqrt.pop %v763
        %v796 = vrsqrt.pop %v764
        %v797 = vrsqrt.pop %v765
        %v798 = vrsqrt.pop %v766
        %v799 = vrsqrt.pop %v767
        %v800 = vrsqrt.pop %v768
        %v801 = vrsqrt.pop %v769
        %v802 = vrsqrt.pop %v770
        %v803 = vrsqrt.pop %v771
        %v804 = vrsqrt.pop %v772
        %v805 = vrsqrt.pop %v773
        %v806 = vrsqrt.pop %v774
        %v807 = vrsqrt.pop %v775
        %v808 = vmul.f32 %v552, %v776
        %v809 = vmul.f32 %v553, %v777
        %v810 = vmul.f32 %v554, %v778
        %v811 = vmul.f32 %v555, %v779
        %v812 = vmul.f32 %v556, %v780
        %v813 = vmul.f32 %v557, %v781
        %v814 = vmul.f32 %v558, %v782
        %v815 = vmul.f32 %v559, %v783
        %v816 = vmul.f32 %v560, %v784
        %v817 = vmul.f32 %v561, %v785
        %v818 = vmul.f32 %v562, %v786
        %v819 = vmul.f32 %v563, %v787
        %v820 = vmul.f32 %v564, %v788
        %v821 = vmul.f32 %v565, %v789
        %v822 = vmul.f32 %v566, %v790
        %v823 = vmul.f32 %v567, %v791
        %v824 = vmul.f32 %v568, %v792
        %v825 = vmul.f32 %v569, %v793
        %v826 = vmul.f32 %v570, %v794
        %v827 = vmul.f32 %v571, %v795
        %v828 = vmul.f32 %v572, %v796
        %v829 = vmul.f32 %v573, %v797
        %v830 = vmul.f32 %v574, %v798
        %v831 = vmul.f32 %v575, %v799
        %v832 = vmul.f32 %v576, %v800
        %v833 = vmul.f32 %v577, %v801
        %v834 = vmul.f32 %v578, %v802
        %v835 = vmul.f32 %v579, %v803
        %v836 = vmul.f32 %v580, %v804
        %v837 = vmul.f32 %v581, %v805
        %v838 = vmul.f32 %v582, %v806
        %v839 = vmul.f32 %v583, %v807
        %v840 = vld [vmem:[%s2] sm:$0x1]
        %v842 = vlaneseq
        %v843 = vshrl.u32 %v842, 7
        %v844 = vsub.s32 0, %v843
        %v845 = vrot.slane %v840, %v844
        %v847 = vmul.f32 %v808, %v845
        %v848 = vmul.f32 %v809, %v845
        %v849 = vmul.f32 %v810, %v845
        %v850 = vmul.f32 %v811, %v845
        %v851 = vmul.f32 %v812, %v845
        %v852 = vmul.f32 %v813, %v845
        %v853 = vmul.f32 %v814, %v845
        %v854 = vmul.f32 %v815, %v845
        %v855 = vmul.f32 %v816, %v845
        %v856 = vmul.f32 %v817, %v845
        %v857 = vmul.f32 %v818, %v845
        %v858 = vmul.f32 %v819, %v845
        %v859 = vmul.f32 %v820, %v845
        %v860 = vmul.f32 %v821, %v845
        %v861 = vmul.f32 %v822, %v845
        %v862 = vmul.f32 %v823, %v845
        %v863 = vmul.f32 %v824, %v845
        %v864 = vmul.f32 %v825, %v845
        %v865 = vmul.f32 %v826, %v845
        %v866 = vmul.f32 %v827, %v845
        %v867 = vmul.f32 %v828, %v845
        %v868 = vmul.f32 %v829, %v845
        %v869 = vmul.f32 %v830, %v845
        %v870 = vmul.f32 %v831, %v845
        %v871 = vmul.f32 %v832, %v845
        %v872 = vmul.f32 %v833, %v845
        %v873 = vmul.f32 %v834, %v845
        %v874 = vmul.f32 %v835, %v845
        %v875 = vmul.f32 %v836, %v845
        %v876 = vmul.f32 %v837, %v845
        %v877 = vmul.f32 %v838, %v845
        %v878 = vmul.f32 %v839, %v845
        %v879 = vld [vmem:[%s3] sm:$0x1]
        %v881 = vlaneseq
        %v882 = vshrl.u32 %v881, 7
        %v883 = vsub.s32 0, %v882
        %v884 = vrot.slane %v879, %v883
        %v886 = vadd.f32 %v847, %v884
        %v887 = vadd.f32 %v848, %v884
        %v888 = vadd.f32 %v849, %v884
        %v889 = vadd.f32 %v850, %v884
        %v890 = vadd.f32 %v851, %v884
        %v891 = vadd.f32 %v852, %v884
        %v892 = vadd.f32 %v853, %v884
        %v893 = vadd.f32 %v854, %v884
        %v894 = vadd.f32 %v855, %v884
        %v895 = vadd.f32 %v856, %v884
        %v896 = vadd.f32 %v857, %v884
        %v897 = vadd.f32 %v858, %v884
        %v898 = vadd.f32 %v859, %v884
        %v899 = vadd.f32 %v860, %v884
        %v900 = vadd.f32 %v861, %v884
        %v901 = vadd.f32 %v862, %v884
        %v902 = vadd.f32 %v863, %v884
        %v903 = vadd.f32 %v864, %v884
        %v904 = vadd.f32 %v865, %v884
        %v905 = vadd.f32 %v866, %v884
        %v906 = vadd.f32 %v867, %v884
        %v907 = vadd.f32 %v868, %v884
        %v908 = vadd.f32 %v869, %v884
        %v909 = vadd.f32 %v870, %v884
        %v910 = vadd.f32 %v871, %v884
        %v911 = vadd.f32 %v872, %v884
        %v912 = vadd.f32 %v873, %v884
        %v913 = vadd.f32 %v874, %v884
        %v914 = vadd.f32 %v875, %v884
        %v915 = vadd.f32 %v876, %v884
        %v916 = vadd.f32 %v877, %v884
        %v917 = vadd.f32 %v878, %v884
        %v918 = vpack.c.bf16 %v887, %v886
        %v919 = vpack.c.bf16 %v889, %v888
        %v920 = vpack.c.bf16 %v891, %v890
        %v921 = vpack.c.bf16 %v893, %v892
        %v922 = vpack.c.bf16 %v895, %v894
        %v923 = vpack.c.bf16 %v897, %v896
        %v924 = vpack.c.bf16 %v899, %v898
        %v925 = vpack.c.bf16 %v901, %v900
        %v926 = vpack.c.bf16 %v903, %v902
        %v927 = vpack.c.bf16 %v905, %v904
        %v928 = vpack.c.bf16 %v907, %v906
        %v929 = vpack.c.bf16 %v909, %v908
        %v930 = vpack.c.bf16 %v911, %v910
        %v931 = vpack.c.bf16 %v913, %v912
        %v932 = vpack.c.bf16 %v915, %v914
        %v933 = vpack.c.bf16 %v917, %v916
        %v934 = vld [vmem:[%s303] sm:$0xf]
        %v935 = vld [vmem:[%s303 + $0x4] sm:$0xf]
        %v936 = vld [vmem:[%s303 + $0x8] sm:$0xf]
        %v937 = vld [vmem:[%s303 + $0xc] sm:$0xf]
        %v938 = vld [vmem:[%s303 + $0x10] sm:$0xf]
        %v939 = vld [vmem:[%s303 + $0x14] sm:$0xf]
        %v940 = vld [vmem:[%s303 + $0x18] sm:$0xf]
        %v941 = vld [vmem:[%s303 + $0x1c] sm:$0xf]
        %v942 = vld [vmem:[%s303 + $0x20] sm:$0xf]
        %v943 = vld [vmem:[%s303 + $0x24] sm:$0xf]
        %v944 = vld [vmem:[%s303 + $0x28] sm:$0xf]
        %v945 = vld [vmem:[%s303 + $0x2c] sm:$0xf]
        %v946 = vld [vmem:[%s303 + $0x30] sm:$0xf]
        %v947 = vld [vmem:[%s303 + $0x34] sm:$0xf]
        %v948 = vld [vmem:[%s303 + $0x38] sm:$0xf]
        %v949 = vld [vmem:[%s303 + $0x3c] sm:$0xf]
        %v950 = vld [vmem:[%s303 + $0x40] sm:$0xf]
        %v951 = vld [vmem:[%s303 + $0x44] sm:$0xf]
        %v952 = vld [vmem:[%s303 + $0x48] sm:$0xf]
        %v953 = vld [vmem:[%s303 + $0x4c] sm:$0xf]
        %v954 = vld [vmem:[%s303 + $0x50] sm:$0xf]
        %v955 = vld [vmem:[%s303 + $0x54] sm:$0xf]
        %v956 = vld [vmem:[%s303 + $0x58] sm:$0xf]
        %v957 = vld [vmem:[%s303 + $0x5c] sm:$0xf]
        %v958 = vld [vmem:[%s303 + $0x60] sm:$0xf]
        %v959 = vld [vmem:[%s303 + $0x64] sm:$0xf]
        %v960 = vld [vmem:[%s303 + $0x68] sm:$0xf]
        %v961 = vld [vmem:[%s303 + $0x6c] sm:$0xf]
        %v962 = vld [vmem:[%s303 + $0x70] sm:$0xf]
        %v963 = vld [vmem:[%s303 + $0x74] sm:$0xf]
        %v964 = vld [vmem:[%s303 + $0x78] sm:$0xf]
        %v965 = vld [vmem:[%s303 + $0x7c] sm:$0xf]
        %v966 = vld [vmem:[%s303 + $0x80] sm:$0xf]
        %v967 = vld [vmem:[%s303 + $0x84] sm:$0xf]
        %v968 = vld [vmem:[%s303 + $0x88] sm:$0xf]
        %v969 = vld [vmem:[%s303 + $0x8c] sm:$0xf]
        %v970 = vld [vmem:[%s303 + $0x90] sm:$0xf]
        %v971 = vld [vmem:[%s303 + $0x94] sm:$0xf]
        %v972 = vld [vmem:[%s303 + $0x98] sm:$0xf]
        %v973 = vld [vmem:[%s303 + $0x9c] sm:$0xf]
        %v974 = vld [vmem:[%s303 + $0xa0] sm:$0xf]
        %v975 = vld [vmem:[%s303 + $0xa4] sm:$0xf]
        %v976 = vld [vmem:[%s303 + $0xa8] sm:$0xf]
        %v977 = vld [vmem:[%s303 + $0xac] sm:$0xf]
        %v978 = vld [vmem:[%s303 + $0xb0] sm:$0xf]
        %v979 = vld [vmem:[%s303 + $0xb4] sm:$0xf]
        %v980 = vld [vmem:[%s303 + $0xb8] sm:$0xf]
        %v981 = vld [vmem:[%s303 + $0xbc] sm:$0xf]
        %v982 = vld [vmem:[%s303 + $0xc0] sm:$0xf]
        %v983 = vld [vmem:[%s303 + $0xc4] sm:$0xf]
        %v984 = vld [vmem:[%s303 + $0xc8] sm:$0xf]
        %v985 = vld [vmem:[%s303 + $0xcc] sm:$0xf]
        %v986 = vld [vmem:[%s303 + $0xd0] sm:$0xf]
        %v987 = vld [vmem:[%s303 + $0xd4] sm:$0xf]
        %v988 = vld [vmem:[%s303 + $0xd8] sm:$0xf]
        %v989 = vld [vmem:[%s303 + $0xdc] sm:$0xf]
        %v990 = vld [vmem:[%s303 + $0xe0] sm:$0xf]
        %v991 = vld [vmem:[%s303 + $0xe4] sm:$0xf]
        %v992 = vld [vmem:[%s303 + $0xe8] sm:$0xf]
        %v993 = vld [vmem:[%s303 + $0xec] sm:$0xf]
        %v994 = vld [vmem:[%s303 + $0xf0] sm:$0xf]
        %v995 = vld [vmem:[%s303 + $0xf4] sm:$0xf]
        %v996 = vld [vmem:[%s303 + $0xf8] sm:$0xf]
        %v997 = vld [vmem:[%s303 + $0xfc] sm:$0xf]
        %v998 = vld [vmem:[%s5] sm:$0xf]
        %v999 = vld [vmem:[%s5 + $0x4] sm:$0xf]
        %v1000 = vld [vmem:[%s6] sm:$0x1]
        %v1002 = vlaneseq
        %v1003 = vshrl.u32 %v1002, 7
        %v1004 = vsub.s32 0, %v1003
        %v1005 = vrot.slane %v1000, %v1004
        %v1071 = vunpack.c.l.b16 %v934
        %v1072 = vunpack.c.l.b16 %v935
        %v1073 = vunpack.c.l.b16 %v936
        %v1074 = vunpack.c.l.b16 %v937
        %v1075 = vunpack.c.l.b16 %v938
        %v1076 = vunpack.c.l.b16 %v939
        %v1077 = vunpack.c.l.b16 %v940
        %v1078 = vunpack.c.l.b16 %v941
        %v1079 = vunpack.c.l.b16 %v942
        %v1080 = vunpack.c.l.b16 %v943
        %v1081 = vunpack.c.l.b16 %v944
        %v1082 = vunpack.c.l.b16 %v945
        %v1083 = vunpack.c.l.b16 %v946
        %v1084 = vunpack.c.l.b16 %v947
        %v1085 = vunpack.c.l.b16 %v948
        %v1086 = vunpack.c.l.b16 %v949
        %v1087 = vunpack.c.l.b16 %v950
        %v1088 = vunpack.c.l.b16 %v951
        %v1089 = vunpack.c.l.b16 %v952
        %v1090 = vunpack.c.l.b16 %v953
        %v1091 = vunpack.c.l.b16 %v954
        %v1092 = vunpack.c.l.b16 %v955
        %v1093 = vunpack.c.l.b16 %v956
        %v1094 = vunpack.c.l.b16 %v957
        %v1095 = vunpack.c.l.b16 %v958
        %v1096 = vunpack.c.l.b16 %v959
        %v1097 = vunpack.c.l.b16 %v960
        %v1098 = vunpack.c.l.b16 %v961
        %v1099 = vunpack.c.l.b16 %v962
        %v1100 = vunpack.c.l.b16 %v963
        %v1101 = vunpack.c.l.b16 %v964
        %v1102 = vunpack.c.l.b16 %v965
        %v1103 = vunpack.c.l.b16 %v966
        %v1104 = vunpack.c.l.b16 %v967
        %v1105 = vunpack.c.l.b16 %v968
        %v1106 = vunpack.c.l.b16 %v969
        %v1107 = vunpack.c.l.b16 %v970
        %v1108 = vunpack.c.l.b16 %v971
        %v1109 = vunpack.c.l.b16 %v972
        %v1110 = vunpack.c.l.b16 %v973
        %v1111 = vunpack.c.l.b16 %v974
        %v1112 = vunpack.c.l.b16 %v975
        %v1113 = vunpack.c.l.b16 %v976
        %v1114 = vunpack.c.l.b16 %v977
        %v1115 = vunpack.c.l.b16 %v978
        %v1116 = vunpack.c.l.b16 %v979
        %v1117 = vunpack.c.l.b16 %v980
        %v1118 = vunpack.c.l.b16 %v981
        %v1119 = vunpack.c.l.b16 %v982
        %v1120 = vunpack.c.l.b16 %v983
        %v1121 = vunpack.c.l.b16 %v984
        %v1122 = vunpack.c.l.b16 %v985
        %v1123 = vunpack.c.l.b16 %v986
        %v1124 = vunpack.c.l.b16 %v987
        %v1125 = vunpack.c.l.b16 %v988
        %v1126 = vunpack.c.l.b16 %v989
        %v1127 = vunpack.c.l.b16 %v990
        %v1128 = vunpack.c.l.b16 %v991
        %v1129 = vunpack.c.l.b16 %v992
        %v1130 = vunpack.c.l.b16 %v993
        %v1131 = vunpack.c.l.b16 %v994
        %v1132 = vunpack.c.l.b16 %v995
        %v1133 = vunpack.c.l.b16 %v996
        %v1134 = vunpack.c.l.b16 %v997
        %v1135 = vpack.c.b16 %v1072, %v1071
        %v1136 = vpack.c.b16 %v1074, %v1073
        %v1137 = vpack.c.b16 %v1076, %v1075
        %v1138 = vpack.c.b16 %v1078, %v1077
        %v1139 = vpack.c.b16 %v1080, %v1079
        %v1140 = vpack.c.b16 %v1082, %v1081
        %v1141 = vpack.c.b16 %v1084, %v1083
        %v1142 = vpack.c.b16 %v1086, %v1085
        %v1143 = vpack.c.b16 %v1088, %v1087
        %v1144 = vpack.c.b16 %v1090, %v1089
        %v1145 = vpack.c.b16 %v1092, %v1091
        %v1146 = vpack.c.b16 %v1094, %v1093
        %v1147 = vpack.c.b16 %v1096, %v1095
        %v1148 = vpack.c.b16 %v1098, %v1097
        %v1149 = vpack.c.b16 %v1100, %v1099
        %v1150 = vpack.c.b16 %v1102, %v1101
        %v1151 = vpack.c.b16 %v1104, %v1103
        %v1152 = vpack.c.b16 %v1106, %v1105
        %v1153 = vpack.c.b16 %v1108, %v1107
        %v1154 = vpack.c.b16 %v1110, %v1109
        %v1155 = vpack.c.b16 %v1112, %v1111
        %v1156 = vpack.c.b16 %v1114, %v1113
        %v1157 = vpack.c.b16 %v1116, %v1115
        %v1158 = vpack.c.b16 %v1118, %v1117
        %v1159 = vpack.c.b16 %v1120, %v1119
        %v1160 = vpack.c.b16 %v1122, %v1121
        %v1161 = vpack.c.b16 %v1124, %v1123
        %v1162 = vpack.c.b16 %v1126, %v1125
        %v1163 = vpack.c.b16 %v1128, %v1127
        %v1164 = vpack.c.b16 %v1130, %v1129
        %v1165 = vpack.c.b16 %v1132, %v1131
        %v1166 = vpack.c.b16 %v1134, %v1133
        %v1169 = vunpack.c.l.b16 %v998
        %v1170 = vunpack.c.l.b16 %v999
        %v1171 = vpack.c.b16 %v1170, %v1169
        %vm1173 = vcmask 130048
        %v1175 = vsel %vm1173, %v1135, 0
        %v1178 = vsel %vm1173, %v1136, 0
        %v1181 = vsel %vm1173, %v1137, 0
        %v1184 = vsel %vm1173, %v1138, 0
        %v1187 = vsel %vm1173, %v1139, 0
        %v1190 = vsel %vm1173, %v1140, 0
        %v1193 = vsel %vm1173, %v1141, 0
        %v1196 = vsel %vm1173, %v1142, 0
        %v1199 = vsel %vm1173, %v1143, 0
        %v1202 = vsel %vm1173, %v1144, 0
        %v1205 = vsel %vm1173, %v1145, 0
        %v1208 = vsel %vm1173, %v1146, 0
        %v1211 = vsel %vm1173, %v1147, 0
        %v1214 = vsel %vm1173, %v1148, 0
        %v1217 = vsel %vm1173, %v1149, 0
        %v1220 = vsel %vm1173, %v1150, 0
        %v1223 = vsel %vm1173, %v1151, 0
        %v1226 = vsel %vm1173, %v1152, 0
        %v1229 = vsel %vm1173, %v1153, 0
        %v1232 = vsel %vm1173, %v1154, 0
        %v1235 = vsel %vm1173, %v1155, 0
        %v1238 = vsel %vm1173, %v1156, 0
        %v1241 = vsel %vm1173, %v1157, 0
        %v1244 = vsel %vm1173, %v1158, 0
        %v1247 = vsel %vm1173, %v1159, 0
        %v1250 = vsel %vm1173, %v1160, 0
        %v1253 = vsel %vm1173, %v1161, 0
        %v1256 = vsel %vm1173, %v1162, 0
        %v1259 = vsel %vm1173, %v1163, 0
        %v1262 = vsel %vm1173, %v1164, 0
        %v1265 = vsel %vm1173, %v1165, 0
        %v1268 = vsel %vm1173, %v1166, 0
        %1270 = vmatprep.subr.bf16.mxu0 0
        %1271 = vmatpush1.bf16.msra.mxu0 %v1171
        %1272 = vmatprep.subr.bf16.mxu0 0
        %1273 = vmatpush1.bf16.msra.mxu0 0
        %1274 = vmatprep.subr.bf16.mxu0 0
        %1275 = vmatpush1.bf16.msra.mxu0 0
        %1276 = vmatprep.subr.bf16.mxu0 0
        %1277 = vmatpush1.bf16.msra.mxu0 0
        %1278 = vmatprep.subr.bf16.mxu0 0
        %1279 = vmatpush1.bf16.msra.mxu0 0
        %1280 = vmatprep.subr.bf16.mxu0 0
        %1281 = vmatpush1.bf16.msra.mxu0 0
        %1282 = vmatprep.subr.bf16.mxu0 0
        %1283 = vmatpush1.bf16.msra.mxu0 0
        %1284 = vmatprep.subr.bf16.mxu0 0
        %1285 = vmatpush1.bf16.msra.mxu0 0
        %1286 = vmatprep.subr.bf16.mxu0 0
        %1287 = vmatpush1.bf16.msra.mxu0 0
        %1288 = vmatprep.subr.bf16.mxu0 0
        %1289 = vmatpush1.bf16.msra.mxu0 0
        %1290 = vmatprep.subr.bf16.mxu0 0
        %1291 = vmatpush1.bf16.msra.mxu0 0
        %1292 = vmatprep.subr.bf16.mxu0 0
        %1293 = vmatpush1.bf16.msra.mxu0 0
        %1294 = vmatprep.subr.bf16.mxu0 0
        %1295 = vmatpush1.bf16.msra.mxu0 0
        %1296 = vmatprep.subr.bf16.mxu0 0
        %1297 = vmatpush1.bf16.msra.mxu0 0
        %1298 = vmatprep.subr.bf16.mxu0 0
        %1299 = vmatpush1.bf16.msra.mxu0 0
        %1300 = vmatprep.subr.bf16.mxu0 0
        %1301 = vmatpush1.bf16.msra.mxu0 0
        %1302 = vmatprep.mubr.bf16.mxu0 0
        %1303 = vmatmul.mubr.bf16.gmra.mrb[0].mxu0 %v1175
        %v1304 = vpop.f32.mrb[0].mxu0
        %v1305 = vadd.f32 %v1005, %v1304
        %v1306 = vpop.f32.mrb[0].mxu0
        %v1307 = vpop.f32.mrb[0].mxu0
        %v1308 = vadd.f32 %v1005, %v1307
        %v1309 = vpop.f32.mrb[0].mxu0
        %1310 = vmatprep.mubr.bf16.mxu0 0
        %1311 = vmatmul.mubr.bf16.gmra.mrb[0].mxu0 %v1178
        %v1312 = vpop.f32.mrb[0].mxu0
        %v1313 = vadd.f32 %v1005, %v1312
        %v1314 = vpop.f32.mrb[0].mxu0
        %v1315 = vpop.f32.mrb[0].mxu0
        %v1316 = vadd.f32 %v1005, %v1315
        %v1317 = vpop.f32.mrb[0].mxu0
        %1318 = vmatprep.mubr.bf16.mxu0 0
        %1319 = vmatmul.mubr.bf16.gmra.mrb[0].mxu0 %v1181
        %v1320 = vpop.f32.mrb[0].mxu0
        %v1321 = vadd.f32 %v1005, %v1320
        %v1322 = vpop.f32.mrb[0].mxu0
        %v1323 = vpop.f32.mrb[0].mxu0
        %v1324 = vadd.f32 %v1005, %v1323
        %v1325 = vpop.f32.mrb[0].mxu0
        %1326 = vmatprep.mubr.bf16.mxu0 0
        %1327 = vmatmul.mubr.bf16.gmra.mrb[0].mxu0 %v1184
        %v1328 = vpop.f32.mrb[0].mxu0
        %v1329 = vadd.f32 %v1005, %v1328
        %v1330 = vpop.f32.mrb[0].mxu0
        %v1331 = vpop.f32.mrb[0].mxu0
        %v1332 = vadd.f32 %v1005, %v1331
        %v1333 = vpop.f32.mrb[0].mxu0
        %1334 = vmatprep.mubr.bf16.mxu0 0
        %1335 = vmatmul.mubr.bf16.gmra.mrb[0].mxu0 %v1187
        %v1336 = vpop.f32.mrb[0].mxu0
        %v1337 = vadd.f32 %v1005, %v1336
        %v1338 = vpop.f32.mrb[0].mxu0
        %v1339 = vpop.f32.mrb[0].mxu0
        %v1340 = vadd.f32 %v1005, %v1339
        %v1341 = vpop.f32.mrb[0].mxu0
        %1342 = vmatprep.mubr.bf16.mxu0 0
        %1343 = vmatmul.mubr.bf16.gmra.mrb[0].mxu0 %v1190
        %v1344 = vpop.f32.mrb[0].mxu0
        %v1345 = vadd.f32 %v1005, %v1344
        %v1346 = vpop.f32.mrb[0].mxu0
        %v1347 = vpop.f32.mrb[0].mxu0
        %v1348 = vadd.f32 %v1005, %v1347
        %v1349 = vpop.f32.mrb[0].mxu0
        %1350 = vmatprep.mubr.bf16.mxu0 0
        %1351 = vmatmul.mubr.bf16.gmra.mrb[0].mxu0 %v1193
        %v1352 = vpop.f32.mrb[0].mxu0
        %v1353 = vadd.f32 %v1005, %v1352
        %v1354 = vpop.f32.mrb[0].mxu0
        %v1355 = vpop.f32.mrb[0].mxu0
        %v1356 = vadd.f32 %v1005, %v1355
        %v1357 = vpop.f32.mrb[0].mxu0
        %1358 = vmatprep.mubr.bf16.mxu0 0
        %1359 = vmatmul.mubr.bf16.gmra.mrb[0].mxu0 %v1196
        %v1360 = vpop.f32.mrb[0].mxu0
        %v1361 = vadd.f32 %v1005, %v1360
        %v1362 = vpop.f32.mrb[0].mxu0
        %v1363 = vpop.f32.mrb[0].mxu0
        %v1364 = vadd.f32 %v1005, %v1363
        %v1365 = vpop.f32.mrb[0].mxu0
        %1366 = vmatprep.mubr.bf16.mxu0 0
        %1367 = vmatmul.mubr.bf16.gmra.mrb[0].mxu0 %v1199
        %v1368 = vpop.f32.mrb[0].mxu0
        %v1369 = vadd.f32 %v1005, %v1368
        %v1370 = vpop.f32.mrb[0].mxu0
        %v1371 = vpop.f32.mrb[0].mxu0
        %v1372 = vadd.f32 %v1005, %v1371
        %v1373 = vpop.f32.mrb[0].mxu0
        %1374 = vmatprep.mubr.bf16.mxu0 0
        %1375 = vmatmul.mubr.bf16.gmra.mrb[0].mxu0 %v1202
        %v1376 = vpop.f32.mrb[0].mxu0
        %v1377 = vadd.f32 %v1005, %v1376
        %v1378 = vpop.f32.mrb[0].mxu0
        %v1379 = vpop.f32.mrb[0].mxu0
        %v1380 = vadd.f32 %v1005, %v1379
        %v1381 = vpop.f32.mrb[0].mxu0
        %1382 = vmatprep.mubr.bf16.mxu0 0
        %1383 = vmatmul.mubr.bf16.gmra.mrb[0].mxu0 %v1205
        %v1384 = vpop.f32.mrb[0].mxu0
        %v1385 = vadd.f32 %v1005, %v1384
        %v1386 = vpop.f32.mrb[0].mxu0
        %v1387 = vpop.f32.mrb[0].mxu0
        %v1388 = vadd.f32 %v1005, %v1387
        %v1389 = vpop.f32.mrb[0].mxu0
        %1390 = vmatprep.mubr.bf16.mxu0 0
        %1391 = vmatmul.mubr.bf16.gmra.mrb[0].mxu0 %v1208
        %v1392 = vpop.f32.mrb[0].mxu0
        %v1393 = vadd.f32 %v1005, %v1392
        %v1394 = vpop.f32.mrb[0].mxu0
        %v1395 = vpop.f32.mrb[0].mxu0
        %v1396 = vadd.f32 %v1005, %v1395
        %v1397 = vpop.f32.mrb[0].mxu0
        %1398 = vmatprep.mubr.bf16.mxu0 0
        %1399 = vmatmul.mubr.bf16.gmra.mrb[0].mxu0 %v1211
        %v1400 = vpop.f32.mrb[0].mxu0
        %v1401 = vadd.f32 %v1005, %v1400
        %v1402 = vpop.f32.mrb[0].mxu0
        %v1403 = vpop.f32.mrb[0].mxu0
        %v1404 = vadd.f32 %v1005, %v1403
        %v1405 = vpop.f32.mrb[0].mxu0
        %1406 = vmatprep.mubr.bf16.mxu0 0
        %1407 = vmatmul.mubr.bf16.gmra.mrb[0].mxu0 %v1214
        %v1408 = vpop.f32.mrb[0].mxu0
        %v1409 = vadd.f32 %v1005, %v1408
        %v1410 = vpop.f32.mrb[0].mxu0
        %v1411 = vpop.f32.mrb[0].mxu0
        %v1412 = vadd.f32 %v1005, %v1411
        %v1413 = vpop.f32.mrb[0].mxu0
        %1414 = vmatprep.mubr.bf16.mxu0 0
        %1415 = vmatmul.mubr.bf16.gmra.mrb[0].mxu0 %v1217
        %v1416 = vpop.f32.mrb[0].mxu0
        %v1417 = vadd.f32 %v1005, %v1416
        %v1418 = vpop.f32.mrb[0].mxu0
        %v1419 = vpop.f32.mrb[0].mxu0
        %v1420 = vadd.f32 %v1005, %v1419
        %v1421 = vpop.f32.mrb[0].mxu0
        %1422 = vmatprep.mubr.bf16.mxu0 0
        %1423 = vmatmul.mubr.bf16.gmra.mrb[0].mxu0 %v1220
        %v1424 = vpop.f32.mrb[0].mxu0
        %v1425 = vadd.f32 %v1005, %v1424
        %v1426 = vpop.f32.mrb[0].mxu0
        %v1427 = vpop.f32.mrb[0].mxu0
        %v1428 = vadd.f32 %v1005, %v1427
        %v1429 = vpop.f32.mrb[0].mxu0
        %1430 = vmatprep.mubr.bf16.mxu0 0
        %1431 = vmatmul.mubr.bf16.gmra.mrb[0].mxu0 %v1223
        %v1432 = vpop.f32.mrb[0].mxu0
        %v1433 = vadd.f32 %v1005, %v1432
        %v1434 = vpop.f32.mrb[0].mxu0
        %v1435 = vpop.f32.mrb[0].mxu0
        %v1436 = vadd.f32 %v1005, %v1435
        %v1437 = vpop.f32.mrb[0].mxu0
        %1438 = vmatprep.mubr.bf16.mxu0 0
        %1439 = vmatmul.mubr.bf16.gmra.mrb[0].mxu0 %v1226
        %v1440 = vpop.f32.mrb[0].mxu0
        %v1441 = vadd.f32 %v1005, %v1440
        %v1442 = vpop.f32.mrb[0].mxu0
        %v1443 = vpop.f32.mrb[0].mxu0
        %v1444 = vadd.f32 %v1005, %v1443
        %v1445 = vpop.f32.mrb[0].mxu0
        %1446 = vmatprep.mubr.bf16.mxu0 0
        %1447 = vmatmul.mubr.bf16.gmra.mrb[0].mxu0 %v1229
        %v1448 = vpop.f32.mrb[0].mxu0
        %v1449 = vadd.f32 %v1005, %v1448
        %v1450 = vpop.f32.mrb[0].mxu0
        %v1451 = vpop.f32.mrb[0].mxu0
        %v1452 = vadd.f32 %v1005, %v1451
        %v1453 = vpop.f32.mrb[0].mxu0
        %1454 = vmatprep.mubr.bf16.mxu0 0
        %1455 = vmatmul.mubr.bf16.gmra.mrb[0].mxu0 %v1232
        %v1456 = vpop.f32.mrb[0].mxu0
        %v1457 = vadd.f32 %v1005, %v1456
        %v1458 = vpop.f32.mrb[0].mxu0
        %v1459 = vpop.f32.mrb[0].mxu0
        %v1460 = vadd.f32 %v1005, %v1459
        %v1461 = vpop.f32.mrb[0].mxu0
        %1462 = vmatprep.mubr.bf16.mxu0 0
        %1463 = vmatmul.mubr.bf16.gmra.mrb[0].mxu0 %v1235
        %v1464 = vpop.f32.mrb[0].mxu0
        %v1465 = vadd.f32 %v1005, %v1464
        %v1466 = vpop.f32.mrb[0].mxu0
        %v1467 = vpop.f32.mrb[0].mxu0
        %v1468 = vadd.f32 %v1005, %v1467
        %v1469 = vpop.f32.mrb[0].mxu0
        %1470 = vmatprep.mubr.bf16.mxu0 0
        %1471 = vmatmul.mubr.bf16.gmra.mrb[0].mxu0 %v1238
        %v1472 = vpop.f32.mrb[0].mxu0
        %v1473 = vadd.f32 %v1005, %v1472
        %v1474 = vpop.f32.mrb[0].mxu0
        %v1475 = vpop.f32.mrb[0].mxu0
        %v1476 = vadd.f32 %v1005, %v1475
        %v1477 = vpop.f32.mrb[0].mxu0
        %1478 = vmatprep.mubr.bf16.mxu0 0
        %1479 = vmatmul.mubr.bf16.gmra.mrb[0].mxu0 %v1241
        %v1480 = vpop.f32.mrb[0].mxu0
        %v1481 = vadd.f32 %v1005, %v1480
        %v1482 = vpop.f32.mrb[0].mxu0
        %v1483 = vpop.f32.mrb[0].mxu0
        %v1484 = vadd.f32 %v1005, %v1483
        %v1485 = vpop.f32.mrb[0].mxu0
        %1486 = vmatprep.mubr.bf16.mxu0 0
        %1487 = vmatmul.mubr.bf16.gmra.mrb[0].mxu0 %v1244
        %v1488 = vpop.f32.mrb[0].mxu0
        %v1489 = vadd.f32 %v1005, %v1488
        %v1490 = vpop.f32.mrb[0].mxu0
        %v1491 = vpop.f32.mrb[0].mxu0
        %v1492 = vadd.f32 %v1005, %v1491
        %v1493 = vpop.f32.mrb[0].mxu0
        %1494 = vmatprep.mubr.bf16.mxu0 0
        %1495 = vmatmul.mubr.bf16.gmra.mrb[0].mxu0 %v1247
        %v1496 = vpop.f32.mrb[0].mxu0
        %v1497 = vadd.f32 %v1005, %v1496
        %v1498 = vpop.f32.mrb[0].mxu0
        %v1499 = vpop.f32.mrb[0].mxu0
        %v1500 = vadd.f32 %v1005, %v1499
        %v1501 = vpop.f32.mrb[0].mxu0
        %1502 = vmatprep.mubr.bf16.mxu0 0
        %1503 = vmatmul.mubr.bf16.gmra.mrb[0].mxu0 %v1250
        %v1504 = vpop.f32.mrb[0].mxu0
        %v1505 = vadd.f32 %v1005, %v1504
        %v1506 = vpop.f32.mrb[0].mxu0
        %v1507 = vpop.f32.mrb[0].mxu0
        %v1508 = vadd.f32 %v1005, %v1507
        %v1509 = vpop.f32.mrb[0].mxu0
        %1510 = vmatprep.mubr.bf16.mxu0 0
        %1511 = vmatmul.mubr.bf16.gmra.mrb[0].mxu0 %v1253
        %v1512 = vpop.f32.mrb[0].mxu0
        %v1513 = vadd.f32 %v1005, %v1512
        %v1514 = vpop.f32.mrb[0].mxu0
        %v1515 = vpop.f32.mrb[0].mxu0
        %v1516 = vadd.f32 %v1005, %v1515
        %v1517 = vpop.f32.mrb[0].mxu0
        %1518 = vmatprep.mubr.bf16.mxu0 0
        %1519 = vmatmul.mubr.bf16.gmra.mrb[0].mxu0 %v1256
        %v1520 = vpop.f32.mrb[0].mxu0
        %v1521 = vadd.f32 %v1005, %v1520
        %v1522 = vpop.f32.mrb[0].mxu0
        %v1523 = vpop.f32.mrb[0].mxu0
        %v1524 = vadd.f32 %v1005, %v1523
        %v1525 = vpop.f32.mrb[0].mxu0
        %1526 = vmatprep.mubr.bf16.mxu0 0
        %1527 = vmatmul.mubr.bf16.gmra.mrb[0].mxu0 %v1259
        %v1528 = vpop.f32.mrb[0].mxu0
        %v1529 = vadd.f32 %v1005, %v1528
        %v1530 = vpop.f32.mrb[0].mxu0
        %v1531 = vpop.f32.mrb[0].mxu0
        %v1532 = vadd.f32 %v1005, %v1531
        %v1533 = vpop.f32.mrb[0].mxu0
        %1534 = vmatprep.mubr.bf16.mxu0 0
        %1535 = vmatmul.mubr.bf16.gmra.mrb[0].mxu0 %v1262
        %v1536 = vpop.f32.mrb[0].mxu0
        %v1537 = vadd.f32 %v1005, %v1536
        %v1538 = vpop.f32.mrb[0].mxu0
        %v1539 = vpop.f32.mrb[0].mxu0
        %v1540 = vadd.f32 %v1005, %v1539
        %v1541 = vpop.f32.mrb[0].mxu0
        %1542 = vmatprep.mubr.bf16.mxu0 0
        %1543 = vmatmul.mubr.bf16.gmra.mrb[0].mxu0 %v1265
        %v1544 = vpop.f32.mrb[0].mxu0
        %v1545 = vadd.f32 %v1005, %v1544
        %v1546 = vpop.f32.mrb[0].mxu0
        %v1547 = vpop.f32.mrb[0].mxu0
        %v1548 = vadd.f32 %v1005, %v1547
        %v1549 = vpop.f32.mrb[0].mxu0
        %1550 = vmatprep.mubr.bf16.mxu0 0
        %1551 = vmatmul.mubr.bf16.gmra.mrb[0].mxu0 %v1268
        %v1552 = vpop.f32.mrb[0].mxu0
        %v1553 = vadd.f32 %v1005, %v1552
        %v1554 = vpop.f32.mrb[0].mxu0
        %v1555 = vpop.f32.mrb[0].mxu0
        %v1556 = vadd.f32 %v1005, %v1555
        %v1557 = vpop.f32.mrb[0].mxu0
        %1558 = vdwg.mxu0
        %v1559 = vld [vmem:[%s4] sm:$0x3]
        %v1561 = vsel %vm422, %v918, 0
        %v1564 = vsel %vm422, %v919, 0
        %v1567 = vsel %vm422, %v920, 0
        %v1570 = vsel %vm422, %v921, 0
        %v1573 = vsel %vm422, %v922, 0
        %v1576 = vsel %vm422, %v923, 0
        %v1579 = vsel %vm422, %v924, 0
        %v1582 = vsel %vm422, %v925, 0
        %v1585 = vsel %vm422, %v926, 0
        %v1588 = vsel %vm422, %v927, 0
        %v1591 = vsel %vm422, %v928, 0
        %v1594 = vsel %vm422, %v929, 0
        %v1597 = vsel %vm422, %v930, 0
        %v1600 = vsel %vm422, %v931, 0
        %v1603 = vsel %vm422, %v932, 0
        %v1606 = vsel %vm422, %v933, 0
        %vm1608 = vcmask 1041408
        %v1610 = vsel %vm1608, %v1559, 0
        %1612 = vmatprep.subr.bf16.mxu0 0
        %1613 = vmatpush1.bf16.msra.mxu0 %v1610
        %1614 = vmatprep.subr.bf16.mxu0 0
        %1615 = vmatpush1.bf16.msra.mxu0 0
        %1616 = vmatprep.subr.bf16.mxu0 0
        %1617 = vmatpush1.bf16.msra.mxu0 0
        %1618 = vmatprep.subr.bf16.mxu0 0
        %1619 = vmatpush1.bf16.msra.mxu0 0
        %1620 = vmatprep.subr.bf16.mxu0 0
        %1621 = vmatpush1.bf16.msra.mxu0 0
        %1622 = vmatprep.subr.bf16.mxu0 0
        %1623 = vmatpush1.bf16.msra.mxu0 0
        %1624 = vmatprep.subr.bf16.mxu0 0
        %1625 = vmatpush1.bf16.msra.mxu0 0
        %1626 = vmatprep.subr.bf16.mxu0 0
        %1627 = vmatpush1.bf16.msra.mxu0 0
        %1628 = vmatprep.subr.bf16.mxu0 0
        %1629 = vmatpush1.bf16.msra.mxu0 0
        %1630 = vmatprep.subr.bf16.mxu0 0
        %1631 = vmatpush1.bf16.msra.mxu0 0
        %1632 = vmatprep.subr.bf16.mxu0 0
        %1633 = vmatpush1.bf16.msra.mxu0 0
        %1634 = vmatprep.subr.bf16.mxu0 0
        %1635 = vmatpush1.bf16.msra.mxu0 0
        %1636 = vmatprep.subr.bf16.mxu0 0
        %1637 = vmatpush1.bf16.msra.mxu0 0
        %1638 = vmatprep.subr.bf16.mxu0 0
        %1639 = vmatpush1.bf16.msra.mxu0 0
        %1640 = vmatprep.subr.bf16.mxu0 0
        %1641 = vmatpush1.bf16.msra.mxu0 0
        %1642 = vmatprep.subr.bf16.mxu0 0
        %1643 = vmatpush1.bf16.msra.mxu0 0
        %1644 = vmatprep.mubr.bf16.mxu0 0
        %1645 = vmatmul.mubr.bf16.gmra.mrb[0].mxu0 %v1561
        %v1646 = vpop.f32.mrb[0].mxu0
        %v1647 = vadd.f32 0.0, %v1646
        %v1648 = vpop.f32.mrb[0].mxu0
        %v1649 = vpop.f32.mrb[0].mxu0
        %v1650 = vadd.f32 0.0, %v1649
        %v1651 = vpop.f32.mrb[0].mxu0
        %1652 = vmatprep.mubr.bf16.mxu0 0
        %1653 = vmatmul.mubr.bf16.gmra.mrb[0].mxu0 %v1564
        %v1654 = vpop.f32.mrb[0].mxu0
        %v1655 = vadd.f32 0.0, %v1654
        %v1656 = vpop.f32.mrb[0].mxu0
        %v1657 = vpop.f32.mrb[0].mxu0
        %v1658 = vadd.f32 0.0, %v1657
        %v1659 = vpop.f32.mrb[0].mxu0
        %1660 = vmatprep.mubr.bf16.mxu0 0
        %1661 = vmatmul.mubr.bf16.gmra.mrb[0].mxu0 %v1567
        %v1662 = vpop.f32.mrb[0].mxu0
        %v1663 = vadd.f32 0.0, %v1662
        %v1664 = vpop.f32.mrb[0].mxu0
        %v1665 = vpop.f32.mrb[0].mxu0
        %v1666 = vadd.f32 0.0, %v1665
        %v1667 = vpop.f32.mrb[0].mxu0
        %1668 = vmatprep.mubr.bf16.mxu0 0
        %1669 = vmatmul.mubr.bf16.gmra.mrb[0].mxu0 %v1570
        %v1670 = vpop.f32.mrb[0].mxu0
        %v1671 = vadd.f32 0.0, %v1670
        %v1672 = vpop.f32.mrb[0].mxu0
        %v1673 = vpop.f32.mrb[0].mxu0
        %v1674 = vadd.f32 0.0, %v1673
        %v1675 = vpop.f32.mrb[0].mxu0
        %1676 = vmatprep.mubr.bf16.mxu0 0
        %1677 = vmatmul.mubr.bf16.gmra.mrb[0].mxu0 %v1573
        %v1678 = vpop.f32.mrb[0].mxu0
        %v1679 = vadd.f32 0.0, %v1678
        %v1680 = vpop.f32.mrb[0].mxu0
        %v1681 = vpop.f32.mrb[0].mxu0
        %v1682 = vadd.f32 0.0, %v1681
        %v1683 = vpop.f32.mrb[0].mxu0
        %1684 = vmatprep.mubr.bf16.mxu0 0
        %1685 = vmatmul.mubr.bf16.gmra.mrb[0].mxu0 %v1576
        %v1686 = vpop.f32.mrb[0].mxu0
        %v1687 = vadd.f32 0.0, %v1686
        %v1688 = vpop.f32.mrb[0].mxu0
        %v1689 = vpop.f32.mrb[0].mxu0
        %v1690 = vadd.f32 0.0, %v1689
        %v1691 = vpop.f32.mrb[0].mxu0
        %1692 = vmatprep.mubr.bf16.mxu0 0
        %1693 = vmatmul.mubr.bf16.gmra.mrb[0].mxu0 %v1579
        %v1694 = vpop.f32.mrb[0].mxu0
        %v1695 = vadd.f32 0.0, %v1694
        %v1696 = vpop.f32.mrb[0].mxu0
        %v1697 = vpop.f32.mrb[0].mxu0
        %v1698 = vadd.f32 0.0, %v1697
        %v1699 = vpop.f32.mrb[0].mxu0
        %1700 = vmatprep.mubr.bf16.mxu0 0
        %1701 = vmatmul.mubr.bf16.gmra.mrb[0].mxu0 %v1582
        %v1702 = vpop.f32.mrb[0].mxu0
        %v1703 = vadd.f32 0.0, %v1702
        %v1704 = vpop.f32.mrb[0].mxu0
        %v1705 = vpop.f32.mrb[0].mxu0
        %v1706 = vadd.f32 0.0, %v1705
        %v1707 = vpop.f32.mrb[0].mxu0
        %1708 = vmatprep.mubr.bf16.mxu0 0
        %1709 = vmatmul.mubr.bf16.gmra.mrb[0].mxu0 %v1585
        %v1710 = vpop.f32.mrb[0].mxu0
        %v1711 = vadd.f32 0.0, %v1710
        %v1712 = vpop.f32.mrb[0].mxu0
        %v1713 = vpop.f32.mrb[0].mxu0
        %v1714 = vadd.f32 0.0, %v1713
        %v1715 = vpop.f32.mrb[0].mxu0
        %1716 = vmatprep.mubr.bf16.mxu0 0
        %1717 = vmatmul.mubr.bf16.gmra.mrb[0].mxu0 %v1588
        %v1718 = vpop.f32.mrb[0].mxu0
        %v1719 = vadd.f32 0.0, %v1718
        %v1720 = vpop.f32.mrb[0].mxu0
        %v1721 = vpop.f32.mrb[0].mxu0
        %v1722 = vadd.f32 0.0, %v1721
        %v1723 = vpop.f32.mrb[0].mxu0
        %1724 = vmatprep.mubr.bf16.mxu0 0
        %1725 = vmatmul.mubr.bf16.gmra.mrb[0].mxu0 %v1591
        %v1726 = vpop.f32.mrb[0].mxu0
        %v1727 = vadd.f32 0.0, %v1726
        %v1728 = vpop.f32.mrb[0].mxu0
        %v1729 = vpop.f32.mrb[0].mxu0
        %v1730 = vadd.f32 0.0, %v1729
        %v1731 = vpop.f32.mrb[0].mxu0
        %1732 = vmatprep.mubr.bf16.mxu0 0
        %1733 = vmatmul.mubr.bf16.gmra.mrb[0].mxu0 %v1594
        %v1734 = vpop.f32.mrb[0].mxu0
        %v1735 = vadd.f32 0.0, %v1734
        %v1736 = vpop.f32.mrb[0].mxu0
        %v1737 = vpop.f32.mrb[0].mxu0
        %v1738 = vadd.f32 0.0, %v1737
        %v1739 = vpop.f32.mrb[0].mxu0
        %1740 = vmatprep.mubr.bf16.mxu0 0
        %1741 = vmatmul.mubr.bf16.gmra.mrb[0].mxu0 %v1597
        %v1742 = vpop.f32.mrb[0].mxu0
        %v1743 = vadd.f32 0.0, %v1742
        %v1744 = vpop.f32.mrb[0].mxu0
        %v1745 = vpop.f32.mrb[0].mxu0
        %v1746 = vadd.f32 0.0, %v1745
        %v1747 = vpop.f32.mrb[0].mxu0
        %1748 = vmatprep.mubr.bf16.mxu0 0
        %1749 = vmatmul.mubr.bf16.gmra.mrb[0].mxu0 %v1600
        %v1750 = vpop.f32.mrb[0].mxu0
        %v1751 = vadd.f32 0.0, %v1750
        %v1752 = vpop.f32.mrb[0].mxu0
        %v1753 = vpop.f32.mrb[0].mxu0
        %v1754 = vadd.f32 0.0, %v1753
        %v1755 = vpop.f32.mrb[0].mxu0
        %1756 = vmatprep.mubr.bf16.mxu0 0
        %1757 = vmatmul.mubr.bf16.gmra.mrb[0].mxu0 %v1603
        %v1758 = vpop.f32.mrb[0].mxu0
        %v1759 = vadd.f32 0.0, %v1758
        %v1760 = vpop.f32.mrb[0].mxu0
        %v1761 = vpop.f32.mrb[0].mxu0
        %v1762 = vadd.f32 0.0, %v1761
        %v1763 = vpop.f32.mrb[0].mxu0
        %1764 = vmatprep.mubr.bf16.mxu0 0
        %1765 = vmatmul.mubr.bf16.gmra.mrb[0].mxu0 %v1606
        %v1766 = vpop.f32.mrb[0].mxu0
        %v1767 = vadd.f32 0.0, %v1766
        %v1768 = vpop.f32.mrb[0].mxu0
        %v1769 = vpop.f32.mrb[0].mxu0
        %v1770 = vadd.f32 0.0, %v1769
        %v1771 = vpop.f32.mrb[0].mxu0
        %1772 = vdwg.mxu0
        %v1773 = vadd.f32 %v1647, %v1305
        %v1774 = vadd.f32 %v1650, %v1308
        %v1775 = vadd.f32 %v1655, %v1321
        %v1776 = vadd.f32 %v1658, %v1324
        %v1777 = vadd.f32 %v1663, %v1337
        %v1778 = vadd.f32 %v1666, %v1340
        %v1779 = vadd.f32 %v1671, %v1353
        %v1780 = vadd.f32 %v1674, %v1356
        %v1781 = vadd.f32 %v1679, %v1369
        %v1782 = vadd.f32 %v1682, %v1372
        %v1783 = vadd.f32 %v1687, %v1385
        %v1784 = vadd.f32 %v1690, %v1388
        %v1785 = vadd.f32 %v1695, %v1401
        %v1786 = vadd.f32 %v1698, %v1404
        %v1787 = vadd.f32 %v1703, %v1417
        %v1788 = vadd.f32 %v1706, %v1420
        %v1789 = vadd.f32 %v1711, %v1433
        %v1790 = vadd.f32 %v1714, %v1436
        %v1791 = vadd.f32 %v1719, %v1449
        %v1792 = vadd.f32 %v1722, %v1452
        %v1793 = vadd.f32 %v1727, %v1465
        %v1794 = vadd.f32 %v1730, %v1468
        %v1795 = vadd.f32 %v1735, %v1481
        %v1796 = vadd.f32 %v1738, %v1484
        %v1797 = vadd.f32 %v1743, %v1497
        %v1798 = vadd.f32 %v1746, %v1500
        %v1799 = vadd.f32 %v1751, %v1513
        %v1800 = vadd.f32 %v1754, %v1516
        %v1801 = vadd.f32 %v1759, %v1529
        %v1802 = vadd.f32 %v1762, %v1532
        %v1803 = vadd.f32 %v1767, %v1545
        %v1804 = vadd.f32 %v1770, %v1548
        %v1805 = vpack.c.bf16 %v1774, %v1773
        %v1806 = vpack.c.bf16 %v1776, %v1775
        %v1807 = vpack.c.bf16 %v1778, %v1777
        %v1808 = vpack.c.bf16 %v1780, %v1779
        %v1809 = vpack.c.bf16 %v1782, %v1781
        %v1810 = vpack.c.bf16 %v1784, %v1783
        %v1811 = vpack.c.bf16 %v1786, %v1785
        %v1812 = vpack.c.bf16 %v1788, %v1787
        %v1813 = vpack.c.bf16 %v1790, %v1789
        %v1814 = vpack.c.bf16 %v1792, %v1791
        %v1815 = vpack.c.bf16 %v1794, %v1793
        %v1816 = vpack.c.bf16 %v1796, %v1795
        %v1817 = vpack.c.bf16 %v1798, %v1797
        %v1818 = vpack.c.bf16 %v1800, %v1799
        %v1819 = vpack.c.bf16 %v1802, %v1801
        %v1820 = vpack.c.bf16 %v1804, %v1803
        %v1837 = vunpack.c.l.b16 %v1805
        %v1838 = vunpack.c.h.b16 %v1805
        %v1839 = vunpack.c.l.b16 %v1806
        %v1840 = vunpack.c.h.b16 %v1806
        %v1841 = vunpack.c.l.b16 %v1807
        %v1842 = vunpack.c.h.b16 %v1807
        %v1843 = vunpack.c.l.b16 %v1808
        %v1844 = vunpack.c.h.b16 %v1808
        %v1845 = vunpack.c.l.b16 %v1809
        %v1846 = vunpack.c.h.b16 %v1809
        %v1847 = vunpack.c.l.b16 %v1810
        %v1848 = vunpack.c.h.b16 %v1810
        %v1849 = vunpack.c.l.b16 %v1811
        %v1850 = vunpack.c.h.b16 %v1811
        %v1851 = vunpack.c.l.b16 %v1812
        %v1852 = vunpack.c.h.b16 %v1812
        %v1853 = vunpack.c.l.b16 %v1813
        %v1854 = vunpack.c.h.b16 %v1813
        %v1855 = vunpack.c.l.b16 %v1814
        %v1856 = vunpack.c.h.b16 %v1814
        %v1857 = vunpack.c.l.b16 %v1815
        %v1858 = vunpack.c.h.b16 %v1815
        %v1859 = vunpack.c.l.b16 %v1816
        %v1860 = vunpack.c.h.b16 %v1816
        %v1861 = vunpack.c.l.b16 %v1817
        %v1862 = vunpack.c.h.b16 %v1817
        %v1863 = vunpack.c.l.b16 %v1818
        %v1864 = vunpack.c.h.b16 %v1818
        %v1865 = vunpack.c.l.b16 %v1819
        %v1866 = vunpack.c.h.b16 %v1819
        %v1867 = vunpack.c.l.b16 %v1820
        %v1868 = vunpack.c.h.b16 %v1820
        %v1869 = vpack.c.b16 %v1837, %v1837
        %v1870 = vpack.c.b16 %v1838, %v1838
        %v1871 = vpack.c.b16 %v1839, %v1839
        %v1872 = vpack.c.b16 %v1840, %v1840
        %v1873 = vpack.c.b16 %v1841, %v1841
        %v1874 = vpack.c.b16 %v1842, %v1842
        %v1875 = vpack.c.b16 %v1843, %v1843
        %v1876 = vpack.c.b16 %v1844, %v1844
        %v1877 = vpack.c.b16 %v1845, %v1845
        %v1878 = vpack.c.b16 %v1846, %v1846
        %v1879 = vpack.c.b16 %v1847, %v1847
        %v1880 = vpack.c.b16 %v1848, %v1848
        %v1881 = vpack.c.b16 %v1849, %v1849
        %v1882 = vpack.c.b16 %v1850, %v1850
        %v1883 = vpack.c.b16 %v1851, %v1851
        %v1884 = vpack.c.b16 %v1852, %v1852
        %v1885 = vpack.c.b16 %v1853, %v1853
        %v1886 = vpack.c.b16 %v1854, %v1854
        %v1887 = vpack.c.b16 %v1855, %v1855
        %v1888 = vpack.c.b16 %v1856, %v1856
        %v1889 = vpack.c.b16 %v1857, %v1857
        %v1890 = vpack.c.b16 %v1858, %v1858
        %v1891 = vpack.c.b16 %v1859, %v1859
        %v1892 = vpack.c.b16 %v1860, %v1860
        %v1893 = vpack.c.b16 %v1861, %v1861
        %v1894 = vpack.c.b16 %v1862, %v1862
        %v1895 = vpack.c.b16 %v1863, %v1863
        %v1896 = vpack.c.b16 %v1864, %v1864
        %v1897 = vpack.c.b16 %v1865, %v1865
        %v1898 = vpack.c.b16 %v1866, %v1866
        %v1899 = vpack.c.b16 %v1867, %v1867
        %v1900 = vpack.c.b16 %v1868, %v1868
        %vm1933 = vcmask 125952
        %1934 = vst.msk [vmem:[%s343] sm:$0xf] %vm1933, %v1869
        %1935 = vst.msk [vmem:[%s343 + $0x4] sm:$0xf] %vm1933, %v1870
        %1936 = vst.msk [vmem:[%s343 + $0x10] sm:$0xf] %vm1933, %v1871
        %1937 = vst.msk [vmem:[%s343 + $0x14] sm:$0xf] %vm1933, %v1872
        %1938 = vst.msk [vmem:[%s343 + $0x20] sm:$0xf] %vm1933, %v1873
        %1939 = vst.msk [vmem:[%s343 + $0x24] sm:$0xf] %vm1933, %v1874
        %1940 = vst.msk [vmem:[%s343 + $0x30] sm:$0xf] %vm1933, %v1875
        %1941 = vst.msk [vmem:[%s343 + $0x34] sm:$0xf] %vm1933, %v1876
        %1942 = vst.msk [vmem:[%s343 + $0x40] sm:$0xf] %vm1933, %v1877
        %1943 = vst.msk [vmem:[%s343 + $0x44] sm:$0xf] %vm1933, %v1878
        %1944 = vst.msk [vmem:[%s343 + $0x50] sm:$0xf] %vm1933, %v1879
        %1945 = vst.msk [vmem:[%s343 + $0x54] sm:$0xf] %vm1933, %v1880
        %1946 = vst.msk [vmem:[%s343 + $0x60] sm:$0xf] %vm1933, %v1881
        %1947 = vst.msk [vmem:[%s343 + $0x64] sm:$0xf] %vm1933, %v1882
        %1948 = vst.msk [vmem:[%s343 + $0x70] sm:$0xf] %vm1933, %v1883
        %1949 = vst.msk [vmem:[%s343 + $0x74] sm:$0xf] %vm1933, %v1884
        %1950 = vst.msk [vmem:[%s343 + $0x80] sm:$0xf] %vm1933, %v1885
        %1951 = vst.msk [vmem:[%s343 + $0x84] sm:$0xf] %vm1933, %v1886
        %1952 = vst.msk [vmem:[%s343 + $0x90] sm:$0xf] %vm1933, %v1887
        %1953 = vst.msk [vmem:[%s343 + $0x94] sm:$0xf] %vm1933, %v1888
        %1954 = vst.msk [vmem:[%s343 + $0xa0] sm:$0xf] %vm1933, %v1889
        %1955 = vst.msk [vmem:[%s343 + $0xa4] sm:$0xf] %vm1933, %v1890
        %1956 = vst.msk [vmem:[%s343 + $0xb0] sm:$0xf] %vm1933, %v1891
        %1957 = vst.msk [vmem:[%s343 + $0xb4] sm:$0xf] %vm1933, %v1892
        %1958 = vst.msk [vmem:[%s343 + $0xc0] sm:$0xf] %vm1933, %v1893
        %1959 = vst.msk [vmem:[%s343 + $0xc4] sm:$0xf] %vm1933, %v1894
        %1960 = vst.msk [vmem:[%s343 + $0xd0] sm:$0xf] %vm1933, %v1895
        %1961 = vst.msk [vmem:[%s343 + $0xd4] sm:$0xf] %vm1933, %v1896
        %1962 = vst.msk [vmem:[%s343 + $0xe0] sm:$0xf] %vm1933, %v1897
        %1963 = vst.msk [vmem:[%s343 + $0xe4] sm:$0xf] %vm1933, %v1898
        %1964 = vst.msk [vmem:[%s343 + $0xf0] sm:$0xf] %vm1933, %v1899
        %1965 = vst.msk [vmem:[%s343 + $0xf4] sm:$0xf] %vm1933, %v1900
        %s1966 = scalar_lea.vmem %s4, 2
        %v1967 = vld [vmem:[%s1966] sm:$0x3]
        %v1969 = vsel %vm1608, %v1967, 0
        %1971 = vmatprep.subr.bf16.mxu0 0
        %1972 = vmatpush1.bf16.msra.mxu0 %v1969
        %1973 = vmatprep.subr.bf16.mxu0 0
        %1974 = vmatpush1.bf16.msra.mxu0 0
        %1975 = vmatprep.subr.bf16.mxu0 0
        %1976 = vmatpush1.bf16.msra.mxu0 0
        %1977 = vmatprep.subr.bf16.mxu0 0
        %1978 = vmatpush1.bf16.msra.mxu0 0
        %1979 = vmatprep.subr.bf16.mxu0 0
        %1980 = vmatpush1.bf16.msra.mxu0 0
        %1981 = vmatprep.subr.bf16.mxu0 0
        %1982 = vmatpush1.bf16.msra.mxu0 0
        %1983 = vmatprep.subr.bf16.mxu0 0
        %1984 = vmatpush1.bf16.msra.mxu0 0
        %1985 = vmatprep.subr.bf16.mxu0 0
        %1986 = vmatpush1.bf16.msra.mxu0 0
        %1987 = vmatprep.subr.bf16.mxu0 0
        %1988 = vmatpush1.bf16.msra.mxu0 0
        %1989 = vmatprep.subr.bf16.mxu0 0
        %1990 = vmatpush1.bf16.msra.mxu0 0
        %1991 = vmatprep.subr.bf16.mxu0 0
        %1992 = vmatpush1.bf16.msra.mxu0 0
        %1993 = vmatprep.subr.bf16.mxu0 0
        %1994 = vmatpush1.bf16.msra.mxu0 0
        %1995 = vmatprep.subr.bf16.mxu0 0
        %1996 = vmatpush1.bf16.msra.mxu0 0
        %1997 = vmatprep.subr.bf16.mxu0 0
        %1998 = vmatpush1.bf16.msra.mxu0 0
        %1999 = vmatprep.subr.bf16.mxu0 0
        %2000 = vmatpush1.bf16.msra.mxu0 0
        %2001 = vmatprep.subr.bf16.mxu0 0
        %2002 = vmatpush1.bf16.msra.mxu0 0
        %2003 = vmatprep.mubr.bf16.mxu0 0
        %2004 = vmatmul.mubr.bf16.gmra.mrb[0].mxu0 %v1561
        %v2005 = vpop.f32.mrb[0].mxu0
        %v2006 = vadd.f32 0.0, %v2005
        %v2007 = vpop.f32.mrb[0].mxu0
        %v2008 = vpop.f32.mrb[0].mxu0
        %v2009 = vadd.f32 0.0, %v2008
        %v2010 = vpop.f32.mrb[0].mxu0
        %2011 = vmatprep.mubr.bf16.mxu0 0
        %2012 = vmatmul.mubr.bf16.gmra.mrb[0].mxu0 %v1564
        %v2013 = vpop.f32.mrb[0].mxu0
        %v2014 = vadd.f32 0.0, %v2013
        %v2015 = vpop.f32.mrb[0].mxu0
        %v2016 = vpop.f32.mrb[0].mxu0
        %v2017 = vadd.f32 0.0, %v2016
        %v2018 = vpop.f32.mrb[0].mxu0
        %2019 = vmatprep.mubr.bf16.mxu0 0
        %2020 = vmatmul.mubr.bf16.gmra.mrb[0].mxu0 %v1567
        %v2021 = vpop.f32.mrb[0].mxu0
        %v2022 = vadd.f32 0.0, %v2021
        %v2023 = vpop.f32.mrb[0].mxu0
        %v2024 = vpop.f32.mrb[0].mxu0
        %v2025 = vadd.f32 0.0, %v2024
        %v2026 = vpop.f32.mrb[0].mxu0
        %2027 = vmatprep.mubr.bf16.mxu0 0
        %2028 = vmatmul.mubr.bf16.gmra.mrb[0].mxu0 %v1570
        %v2029 = vpop.f32.mrb[0].mxu0
        %v2030 = vadd.f32 0.0, %v2029
        %v2031 = vpop.f32.mrb[0].mxu0
        %v2032 = vpop.f32.mrb[0].mxu0
        %v2033 = vadd.f32 0.0, %v2032
        %v2034 = vpop.f32.mrb[0].mxu0
        %2035 = vmatprep.mubr.bf16.mxu0 0
        %2036 = vmatmul.mubr.bf16.gmra.mrb[0].mxu0 %v1573
        %v2037 = vpop.f32.mrb[0].mxu0
        %v2038 = vadd.f32 0.0, %v2037
        %v2039 = vpop.f32.mrb[0].mxu0
        %v2040 = vpop.f32.mrb[0].mxu0
        %v2041 = vadd.f32 0.0, %v2040
        %v2042 = vpop.f32.mrb[0].mxu0
        %2043 = vmatprep.mubr.bf16.mxu0 0
        %2044 = vmatmul.mubr.bf16.gmra.mrb[0].mxu0 %v1576
        %v2045 = vpop.f32.mrb[0].mxu0
        %v2046 = vadd.f32 0.0, %v2045
        %v2047 = vpop.f32.mrb[0].mxu0
        %v2048 = vpop.f32.mrb[0].mxu0
        %v2049 = vadd.f32 0.0, %v2048
        %v2050 = vpop.f32.mrb[0].mxu0
        %2051 = vmatprep.mubr.bf16.mxu0 0
        %2052 = vmatmul.mubr.bf16.gmra.mrb[0].mxu0 %v1579
        %v2053 = vpop.f32.mrb[0].mxu0
        %v2054 = vadd.f32 0.0, %v2053
        %v2055 = vpop.f32.mrb[0].mxu0
        %v2056 = vpop.f32.mrb[0].mxu0
        %v2057 = vadd.f32 0.0, %v2056
        %v2058 = vpop.f32.mrb[0].mxu0
        %2059 = vmatprep.mubr.bf16.mxu0 0
        %2060 = vmatmul.mubr.bf16.gmra.mrb[0].mxu0 %v1582
        %v2061 = vpop.f32.mrb[0].mxu0
        %v2062 = vadd.f32 0.0, %v2061
        %v2063 = vpop.f32.mrb[0].mxu0
        %v2064 = vpop.f32.mrb[0].mxu0
        %v2065 = vadd.f32 0.0, %v2064
        %v2066 = vpop.f32.mrb[0].mxu0
        %2067 = vmatprep.mubr.bf16.mxu0 0
        %2068 = vmatmul.mubr.bf16.gmra.mrb[0].mxu0 %v1585
        %v2069 = vpop.f32.mrb[0].mxu0
        %v2070 = vadd.f32 0.0, %v2069
        %v2071 = vpop.f32.mrb[0].mxu0
        %v2072 = vpop.f32.mrb[0].mxu0
        %v2073 = vadd.f32 0.0, %v2072
        %v2074 = vpop.f32.mrb[0].mxu0
        %2075 = vmatprep.mubr.bf16.mxu0 0
        %2076 = vmatmul.mubr.bf16.gmra.mrb[0].mxu0 %v1588
        %v2077 = vpop.f32.mrb[0].mxu0
        %v2078 = vadd.f32 0.0, %v2077
        %v2079 = vpop.f32.mrb[0].mxu0
        %v2080 = vpop.f32.mrb[0].mxu0
        %v2081 = vadd.f32 0.0, %v2080
        %v2082 = vpop.f32.mrb[0].mxu0
        %2083 = vmatprep.mubr.bf16.mxu0 0
        %2084 = vmatmul.mubr.bf16.gmra.mrb[0].mxu0 %v1591
        %v2085 = vpop.f32.mrb[0].mxu0
        %v2086 = vadd.f32 0.0, %v2085
        %v2087 = vpop.f32.mrb[0].mxu0
        %v2088 = vpop.f32.mrb[0].mxu0
        %v2089 = vadd.f32 0.0, %v2088
        %v2090 = vpop.f32.mrb[0].mxu0
        %2091 = vmatprep.mubr.bf16.mxu0 0
        %2092 = vmatmul.mubr.bf16.gmra.mrb[0].mxu0 %v1594
        %v2093 = vpop.f32.mrb[0].mxu0
        %v2094 = vadd.f32 0.0, %v2093
        %v2095 = vpop.f32.mrb[0].mxu0
        %v2096 = vpop.f32.mrb[0].mxu0
        %v2097 = vadd.f32 0.0, %v2096
        %v2098 = vpop.f32.mrb[0].mxu0
        %2099 = vmatprep.mubr.bf16.mxu0 0
        %2100 = vmatmul.mubr.bf16.gmra.mrb[0].mxu0 %v1597
        %v2101 = vpop.f32.mrb[0].mxu0
        %v2102 = vadd.f32 0.0, %v2101
        %v2103 = vpop.f32.mrb[0].mxu0
        %v2104 = vpop.f32.mrb[0].mxu0
        %v2105 = vadd.f32 0.0, %v2104
        %v2106 = vpop.f32.mrb[0].mxu0
        %2107 = vmatprep.mubr.bf16.mxu0 0
        %2108 = vmatmul.mubr.bf16.gmra.mrb[0].mxu0 %v1600
        %v2109 = vpop.f32.mrb[0].mxu0
        %v2110 = vadd.f32 0.0, %v2109
        %v2111 = vpop.f32.mrb[0].mxu0
        %v2112 = vpop.f32.mrb[0].mxu0
        %v2113 = vadd.f32 0.0, %v2112
        %v2114 = vpop.f32.mrb[0].mxu0
        %2115 = vmatprep.mubr.bf16.mxu0 0
        %2116 = vmatmul.mubr.bf16.gmra.mrb[0].mxu0 %v1603
        %v2117 = vpop.f32.mrb[0].mxu0
        %v2118 = vadd.f32 0.0, %v2117
        %v2119 = vpop.f32.mrb[0].mxu0
        %v2120 = vpop.f32.mrb[0].mxu0
        %v2121 = vadd.f32 0.0, %v2120
        %v2122 = vpop.f32.mrb[0].mxu0
        %2123 = vmatprep.mubr.bf16.mxu0 0
        %2124 = vmatmul.mubr.bf16.gmra.mrb[0].mxu0 %v1606
        %v2125 = vpop.f32.mrb[0].mxu0
        %v2126 = vadd.f32 0.0, %v2125
        %v2127 = vpop.f32.mrb[0].mxu0
        %v2128 = vpop.f32.mrb[0].mxu0
        %v2129 = vadd.f32 0.0, %v2128
        %v2130 = vpop.f32.mrb[0].mxu0
        %2131 = vdwg.mxu0
        %v2132 = vadd.f32 %v2006, %v1313
        %v2133 = vadd.f32 %v2009, %v1316
        %v2134 = vadd.f32 %v2014, %v1329
        %v2135 = vadd.f32 %v2017, %v1332
        %v2136 = vadd.f32 %v2022, %v1345
        %v2137 = vadd.f32 %v2025, %v1348
        %v2138 = vadd.f32 %v2030, %v1361
        %v2139 = vadd.f32 %v2033, %v1364
        %v2140 = vadd.f32 %v2038, %v1377
        %v2141 = vadd.f32 %v2041, %v1380
        %v2142 = vadd.f32 %v2046, %v1393
        %v2143 = vadd.f32 %v2049, %v1396
        %v2144 = vadd.f32 %v2054, %v1409
        %v2145 = vadd.f32 %v2057, %v1412
        %v2146 = vadd.f32 %v2062, %v1425
        %v2147 = vadd.f32 %v2065, %v1428
        %v2148 = vadd.f32 %v2070, %v1441
        %v2149 = vadd.f32 %v2073, %v1444
        %v2150 = vadd.f32 %v2078, %v1457
        %v2151 = vadd.f32 %v2081, %v1460
        %v2152 = vadd.f32 %v2086, %v1473
        %v2153 = vadd.f32 %v2089, %v1476
        %v2154 = vadd.f32 %v2094, %v1489
        %v2155 = vadd.f32 %v2097, %v1492
        %v2156 = vadd.f32 %v2102, %v1505
        %v2157 = vadd.f32 %v2105, %v1508
        %v2158 = vadd.f32 %v2110, %v1521
        %v2159 = vadd.f32 %v2113, %v1524
        %v2160 = vadd.f32 %v2118, %v1537
        %v2161 = vadd.f32 %v2121, %v1540
        %v2162 = vadd.f32 %v2126, %v1553
        %v2163 = vadd.f32 %v2129, %v1556
        %v2164 = vpack.c.bf16 %v2133, %v2132
        %v2165 = vpack.c.bf16 %v2135, %v2134
        %v2166 = vpack.c.bf16 %v2137, %v2136
        %v2167 = vpack.c.bf16 %v2139, %v2138
        %v2168 = vpack.c.bf16 %v2141, %v2140
        %v2169 = vpack.c.bf16 %v2143, %v2142
        %v2170 = vpack.c.bf16 %v2145, %v2144
        %v2171 = vpack.c.bf16 %v2147, %v2146
        %v2172 = vpack.c.bf16 %v2149, %v2148
        %v2173 = vpack.c.bf16 %v2151, %v2150
        %v2174 = vpack.c.bf16 %v2153, %v2152
        %v2175 = vpack.c.bf16 %v2155, %v2154
        %v2176 = vpack.c.bf16 %v2157, %v2156
        %v2177 = vpack.c.bf16 %v2159, %v2158
        %v2178 = vpack.c.bf16 %v2161, %v2160
        %v2179 = vpack.c.bf16 %v2163, %v2162
        %v2196 = vunpack.c.l.b16 %v2164
        %v2197 = vunpack.c.h.b16 %v2164
        %v2198 = vunpack.c.l.b16 %v2165
        %v2199 = vunpack.c.h.b16 %v2165
        %v2200 = vunpack.c.l.b16 %v2166
        %v2201 = vunpack.c.h.b16 %v2166
        %v2202 = vunpack.c.l.b16 %v2167
        %v2203 = vunpack.c.h.b16 %v2167
        %v2204 = vunpack.c.l.b16 %v2168
        %v2205 = vunpack.c.h.b16 %v2168
        %v2206 = vunpack.c.l.b16 %v2169
        %v2207 = vunpack.c.h.b16 %v2169
        %v2208 = vunpack.c.l.b16 %v2170
        %v2209 = vunpack.c.h.b16 %v2170
        %v2210 = vunpack.c.l.b16 %v2171
        %v2211 = vunpack.c.h.b16 %v2171
        %v2212 = vunpack.c.l.b16 %v2172
        %v2213 = vunpack.c.h.b16 %v2172
        %v2214 = vunpack.c.l.b16 %v2173
        %v2215 = vunpack.c.h.b16 %v2173
        %v2216 = vunpack.c.l.b16 %v2174
        %v2217 = vunpack.c.h.b16 %v2174
        %v2218 = vunpack.c.l.b16 %v2175
        %v2219 = vunpack.c.h.b16 %v2175
        %v2220 = vunpack.c.l.b16 %v2176
        %v2221 = vunpack.c.h.b16 %v2176
        %v2222 = vunpack.c.l.b16 %v2177
        %v2223 = vunpack.c.h.b16 %v2177
        %v2224 = vunpack.c.l.b16 %v2178
        %v2225 = vunpack.c.h.b16 %v2178
        %v2226 = vunpack.c.l.b16 %v2179
        %v2227 = vunpack.c.h.b16 %v2179
        %v2228 = vpack.c.b16 %v2196, %v2196
        %v2229 = vpack.c.b16 %v2197, %v2197
        %v2230 = vpack.c.b16 %v2198, %v2198
        %v2231 = vpack.c.b16 %v2199, %v2199
        %v2232 = vpack.c.b16 %v2200, %v2200
        %v2233 = vpack.c.b16 %v2201, %v2201
        %v2234 = vpack.c.b16 %v2202, %v2202
        %v2235 = vpack.c.b16 %v2203, %v2203
        %v2236 = vpack.c.b16 %v2204, %v2204
        %v2237 = vpack.c.b16 %v2205, %v2205
        %v2238 = vpack.c.b16 %v2206, %v2206
        %v2239 = vpack.c.b16 %v2207, %v2207
        %v2240 = vpack.c.b16 %v2208, %v2208
        %v2241 = vpack.c.b16 %v2209, %v2209
        %v2242 = vpack.c.b16 %v2210, %v2210
        %v2243 = vpack.c.b16 %v2211, %v2211
        %v2244 = vpack.c.b16 %v2212, %v2212
        %v2245 = vpack.c.b16 %v2213, %v2213
        %v2246 = vpack.c.b16 %v2214, %v2214
        %v2247 = vpack.c.b16 %v2215, %v2215
        %v2248 = vpack.c.b16 %v2216, %v2216
        %v2249 = vpack.c.b16 %v2217, %v2217
        %v2250 = vpack.c.b16 %v2218, %v2218
        %v2251 = vpack.c.b16 %v2219, %v2219
        %v2252 = vpack.c.b16 %v2220, %v2220
        %v2253 = vpack.c.b16 %v2221, %v2221
        %v2254 = vpack.c.b16 %v2222, %v2222
        %v2255 = vpack.c.b16 %v2223, %v2223
        %v2256 = vpack.c.b16 %v2224, %v2224
        %v2257 = vpack.c.b16 %v2225, %v2225
        %v2258 = vpack.c.b16 %v2226, %v2226
        %v2259 = vpack.c.b16 %v2227, %v2227
        %s2292 = scalar_lea.vmem %s343, 8 [#allocation5]
        %2293 = vst.msk [vmem:[%s2292] sm:$0xf] %vm1933, %v2228
        %2294 = vst.msk [vmem:[%s2292 + $0x4] sm:$0xf] %vm1933, %v2229
        %2295 = vst.msk [vmem:[%s2292 + $0x10] sm:$0xf] %vm1933, %v2230
        %2296 = vst.msk [vmem:[%s2292 + $0x14] sm:$0xf] %vm1933, %v2231
        %2297 = vst.msk [vmem:[%s2292 + $0x20] sm:$0xf] %vm1933, %v2232
        %2298 = vst.msk [vmem:[%s2292 + $0x24] sm:$0xf] %vm1933, %v2233
        %2299 = vst.msk [vmem:[%s2292 + $0x30] sm:$0xf] %vm1933, %v2234
        %2300 = vst.msk [vmem:[%s2292 + $0x34] sm:$0xf] %vm1933, %v2235
        %2301 = vst.msk [vmem:[%s2292 + $0x40] sm:$0xf] %vm1933, %v2236
        %2302 = vst.msk [vmem:[%s2292 + $0x44] sm:$0xf] %vm1933, %v2237
        %2303 = vst.msk [vmem:[%s2292 + $0x50] sm:$0xf] %vm1933, %v2238
        %2304 = vst.msk [vmem:[%s2292 + $0x54] sm:$0xf] %vm1933, %v2239
        %2305 = vst.msk [vmem:[%s2292 + $0x60] sm:$0xf] %vm1933, %v2240
        %2306 = vst.msk [vmem:[%s2292 + $0x64] sm:$0xf] %vm1933, %v2241
        %2307 = vst.msk [vmem:[%s2292 + $0x70] sm:$0xf] %vm1933, %v2242
        %2308 = vst.msk [vmem:[%s2292 + $0x74] sm:$0xf] %vm1933, %v2243
        %2309 = vst.msk [vmem:[%s2292 + $0x80] sm:$0xf] %vm1933, %v2244
        %2310 = vst.msk [vmem:[%s2292 + $0x84] sm:$0xf] %vm1933, %v2245
        %2311 = vst.msk [vmem:[%s2292 + $0x90] sm:$0xf] %vm1933, %v2246
        %2312 = vst.msk [vmem:[%s2292 + $0x94] sm:$0xf] %vm1933, %v2247
        %2313 = vst.msk [vmem:[%s2292 + $0xa0] sm:$0xf] %vm1933, %v2248
        %2314 = vst.msk [vmem:[%s2292 + $0xa4] sm:$0xf] %vm1933, %v2249
        %2315 = vst.msk [vmem:[%s2292 + $0xb0] sm:$0xf] %vm1933, %v2250
        %2316 = vst.msk [vmem:[%s2292 + $0xb4] sm:$0xf] %vm1933, %v2251
        %2317 = vst.msk [vmem:[%s2292 + $0xc0] sm:$0xf] %vm1933, %v2252
        %2318 = vst.msk [vmem:[%s2292 + $0xc4] sm:$0xf] %vm1933, %v2253
        %2319 = vst.msk [vmem:[%s2292 + $0xd0] sm:$0xf] %vm1933, %v2254
        %2320 = vst.msk [vmem:[%s2292 + $0xd4] sm:$0xf] %vm1933, %v2255
        %2321 = vst.msk [vmem:[%s2292 + $0xe0] sm:$0xf] %vm1933, %v2256
        %2322 = vst.msk [vmem:[%s2292 + $0xe4] sm:$0xf] %vm1933, %v2257
        %2323 = vst.msk [vmem:[%s2292 + $0xf0] sm:$0xf] %vm1933, %v2258
        %2324 = vst.msk [vmem:[%s2292 + $0xf4] sm:$0xf] %vm1933, %v2259
        %s2325 = sand.u32 %s207, 1
        %s2326 = scalar_lea.sflag [#allocation4], %s2325
        %s2327 = sand.u32 %s207, 1
        %s2328 = smul.addr %s2327, 256
        %s2329 = scalar_lea.vmem [#allocation5], %s2328
        // Predicated region
        $region53: #{tpu_custom_call.1} parent=47 // pred_check
          %p2330 = pneg %p217
        $region54: #{tpu_custom_call.1} parent=47 // pred_check_branch
          %2332 = sbr.rel (%p2330) target = $region56
        $region55: #{tpu_custom_call.1} parent=47 // pred_region
          %s2333 = smul.u32 16, %s29
          %s2335 = ssub.s32 4096, 4096
          %2336 = vsyncadd %s2326, %s2335
          %s2337 = smul.addr %s2333, 4
          %s2338 = smul.addr %s28, 64
          %s2339 = sadd.s32 %s2337, %s2338
          %s2340 = smul.addr %s2339, 64
          %s2341 = scalar_lea.hbm %s7, %s2340
          %s2342 = sshll.u32 %s2329, 4
          %s2343 = int_to_ptr.vmem [resolvable:$true] %s2342
          %2348 = dma.vmem_to_hbm [thread:$0]  %s2343, 4096, %s2341, %s2326, 64, 64, 4
        $region56: #{tpu_custom_call.1} parent=47 // pred_fallthru
          _
      $region48: #{tpu_custom_call.1} parent=5 // pred_fallthru
        _
      %p2349 = scmp.le.s32.totalorder 2, %s19
      // Predicated region
      $region57: #{tpu_custom_call.1} parent=5 // pred_check
        %p2350 = pneg %p2349
      $region58: #{tpu_custom_call.1} parent=5 // pred_check_branch
        %2352 = sbr.rel (%p2350) target = $region60
      $region59: #{tpu_custom_call.1} parent=5 // pred_region
        %s2353 = ssub.s32 %s19, 2
        // Predicated region
        $region61: #{tpu_custom_call.1} parent=59 // pred_check
          %p2354 = pneg %p223
        $region62: #{tpu_custom_call.1} parent=59 // pred_check_branch
          %2356 = sbr.rel (%p2354) target = $region64
        $region63: #{tpu_custom_call.1} parent=59 // pred_region
          %s2357 = sand.u32 %s208, 1
          %s2358 = scalar_lea.sflag [#allocation4], %s2357
          %s2359 = sand.u32 %s208, 1
          %s2360 = smul.addr %s2359, 256
          %s2361 = scalar_lea.vmem [#allocation5], %s2360
          %2362 = dma.done %s2358, 4096
        $region64: #{tpu_custom_call.1} parent=59 // pred_fallthru
          _
      $region60: #{tpu_custom_call.1} parent=5 // pred_fallthru
        _
    $region6: #{tpu_custom_call.1} parent=1 // loop_footer
      %s23 = sadd.s32 1, %s19
    $region7: #{tpu_custom_call.1} parent=1 // loop_footer_branch
      %18 = sbr.rel target = $region3
    $region8: #{tpu_custom_call.1} parent=1 // loop_exit
      _
    %2363 = vsyncpa [#allocation3], 1
    %s2364 = scalar_lea.sflag [#allocation3], 1
    %2365 = vsyncpa %s2364, 1
    %2366 = vsyncpa [#allocation4], 1
    %s2367 = scalar_lea.sflag [#allocation4], 1
    %2368 = vsyncpa %s2367, 1

</llo_original>
